<compile_context>
chip_gen: v7x
topology: tpu7x:2x2x1
jax: 0.10.0
libtpu: 0.0.40
codegen_flags: <defaults>
</compile_context>

<pallas_src>
import jax
import jax.numpy as jnp
from jax.experimental import pallas as pl
from jax.experimental.pallas import tpu as pltpu

_EPS = 1e-5  # torch.nn.BatchNorm2d default eps


# ---------------------------------------------------------------------------
# Fused kernel: maxpool + 3 x (conv3x3 + BN(train) + ReLU)
# ---------------------------------------------------------------------------
def _pathway_kernel(x4_ref, w1_ref, w2_ref, l_ref, g_ref, be_ref,
                    r_ref, rt_ref, o_ref):
    # x4_ref : (4, N*H, W*C)  the 4 elements of every 2x2 pooling window, each
    #                         as a lane-dense slab (rows=(n,y), lanes=(x,c))
    # w1_ref : (3, W*C, W*C)  conv1 weights, block-tridiagonal per vertical tap
    # w2_ref : (3, W*C, W*C)  conv2d_add weights (shared by stages 2 and 3)
    # l_ref  : (3, N*H, N*H)  banded row-shift matrices (vertical taps + pad)
    # g_ref  : (3, W*C)       BN gammas, pre-tiled onto lanes (one row per BN)
    # be_ref : (3, W*C)       BN betas, pre-tiled onto lanes
    # r_ref  : (W*C, C)       0/1 reduce matrix   lanes -> channels
    # rt_ref : (C, W*C)       0/1 broadcast matrix channels -> lanes
    # o_ref  : (N*H, W*C)     output, same lane-dense layout as the input slabs
    nh, wc = o_ref.shape
    c = r_ref.shape[1]
    inv_count = 1.0 / float(nh * (wc // c))   # 1 / (N*H*W)

    # --- fused 2x2 max-pool: elementwise max of 4 lane-dense slabs (pure VPU) ---
    act = jnp.maximum(jnp.maximum(x4_ref[0], x4_ref[1]),
                      jnp.maximum(x4_ref[2], x4_ref[3]))          # (N*H, W*C)

    r = r_ref[...]
    rt = rt_ref[...]

    def conv_bn_relu(a, w_ref, layer):
        # 3x3 conv = sum over vertical taps of (row-shift) @ a @ (banded weight)
        acc = jnp.zeros((nh, wc), jnp.float32)
        for ky in range(3):
            shifted = jnp.dot(l_ref[ky], a, preferred_element_type=jnp.float32)
            acc = acc + jnp.dot(shifted, w_ref[ky],
                                preferred_element_type=jnp.float32)
        # Conv bias omitted: training-mode BN mean subtraction cancels it.
        # BatchNorm2d, training mode: batch statistics, biased variance.
        col_sum = jnp.sum(acc, axis=0, keepdims=True)                      # (1, W*C)
        ch_mean = jnp.dot(col_sum, r,
                          preferred_element_type=jnp.float32) * inv_count  # (1, C)
        mean_l = jnp.dot(ch_mean, rt, preferred_element_type=jnp.float32)  # (1, W*C)
        cen = acc - mean_l
        ch_var = jnp.dot(jnp.sum(cen * cen, axis=0, keepdims=True), r,
                         preferred_element_type=jnp.float32) * inv_count   # (1, C)
        inv_l = jnp.dot(jax.lax.rsqrt(ch_var + _EPS), rt,
                        preferred_element_type=jnp.float32)                # (1, W*C)
        y = cen * inv_l * g_ref[layer:layer + 1, :] + be_ref[layer:layer + 1, :]
        return jnp.maximum(y, 0.0)

    act = conv_bn_relu(act, w1_ref, 0)
    act = conv_bn_relu(act, w2_ref, 1)
    act = conv_bn_relu(act, w2_ref, 2)   # shared conv2d_add weights, VMEM-resident
    o_ref[...] = act


# ---------------------------------------------------------------------------
# Wrapper (NCHW in / NCHW out, matching the PyTorch module)
# ---------------------------------------------------------------------------
def single_top_view_pathway(x_nchw, consts):
    n, c, h2, w2 = x_nchw.shape
    h, w = h2 // 2, w2 // 2
    wc = w * c

    x = jnp.transpose(x_nchw, (0, 2, 3, 1)).astype(jnp.float32)   # glue: NCHW -> NHWC
    # glue: present the 4 elements of each 2x2 pooling window as lane-dense slabs
    slabs = jnp.stack([x[:, sy::2, sx::2, :].reshape(n * h, wc)
                       for sy in (0, 1) for sx in (0, 1)])          # (4, N*H, W*C)

    vmem = pl.BlockSpec(memory_space=pltpu.MemorySpace.VMEM)
    out2d = pl.pallas_call(
        _pathway_kernel,
        out_shape=jax.ShapeDtypeStruct((n * h, wc), jnp.float32),
        in_specs=[vmem] * 8,
        out_specs=vmem,
        # TODO(synk): on a 2-TensorCore chip (v7x) at larger sizes, add a
        # "parallel" grid axis over rows and reduce BN sum/sumsq across tiles.
    )(slabs, consts["w1_big"], consts["w2_big"], consts["lshift"],
      consts["g_lanes"], consts["be_lanes"], consts["r"], consts["rt"])

    return jnp.transpose(out2d.reshape(n, h, w, c), (0, 3, 1, 2))   # glue: -> NCHW


# ---------------------------------------------------------------------------
# Parameters (deterministic, mirrors _initialize_weights) + kernel constants
# ---------------------------------------------------------------------------
def init_params(key, channels):
    k1, k2 = jax.random.split(key)
    w1_t = jax.random.normal(k1, (channels, channels, 3, 3), jnp.float32) * 0.02
    w2_t = jax.random.normal(k2, (channels, channels, 3, 3), jnp.float32) * 0.02  # conv2d_add (shared)
    # TODO(synk): BatchNorm running_mean/var are not tracked (training-mode
    # forward does not read them); add buffer updates if eval mode is needed.
    return {
        "w1_t": w1_t,
        "w2_t": w2_t,
        "biases": jnp.zeros((2, channels), jnp.float32),   # conv biases (zero init)
        "gammas": jnp.ones((3, channels), jnp.float32),    # 3 distinct BatchNorm2d
        "betas": jnp.zeros((3, channels), jnp.float32),
    }


def _fold_conv_weights(w_t, width):
    """(Co, Ci, 3, 3) torch conv weight -> (3, W*Ci, W*Co) block-tridiagonal taps.

    big[ky, x_src*C + ci, x_out*C + co] = w_t[co, ci, ky, x_src - x_out + 1]
    (zero outside the band): horizontal taps + SAME padding in W folded into a
    single lane-dense matmul per vertical tap ky.
    """
    c = w_t.shape[1]
    wk = jnp.transpose(w_t, (2, 3, 1, 0))                              # (ky, kx, Ci, Co)
    xs = jnp.arange(width)
    band = ((xs[None, :, None] - xs[None, None, :]) ==
            (jnp.arange(3)[:, None, None] - 1)).astype(jnp.float32)    # (kx, x_src, x_out)
    big = jnp.einsum('kab,ykio->yaibo', band, wk)                      # (ky, x_src, Ci, x_out, Co)
    return big.reshape(3, width * c, width * c)


def _row_shift_mats(batch, height):
    """(3, N*H, N*H): L[ky] @ act shifts rows by (ky - 1) with zero fill,
    block-diagonal per image (== vertical taps + SAME padding in H)."""
    ys = jnp.arange(height)
    s = ((ys[None, None, :] - ys[None, :, None]) ==
         (jnp.arange(3)[:, None, None] - 1)).astype(jnp.float32)       # (ky, y_out, y_src)
    big = jnp.einsum('nm,kab->knamb', jnp.eye(batch, dtype=jnp.float32), s)
    return big.reshape(3, batch * height, batch * height)


def prepare_kernel_consts(params, input_shape):
    """Precompute the lane-dense operands consumed by the fused kernel."""
    n, c, h2, w2 = input_shape
    h, w = h2 // 2, w2 // 2
    r = jnp.tile(jnp.eye(c, dtype=jnp.float32), (w, 1))                # (W*C, C)
    return {
        "w1_big": _fold_conv_weights(params["w1_t"], w),
        "w2_big": _fold_conv_weights(params["w2_t"], w),
        "lshift": _row_shift_mats(n, h),
        "g_lanes": jnp.tile(params["gammas"], (1, w)),                 # (3, W*C)
        "be_lanes": jnp.tile(params["betas"], (1, w)),                 # (3, W*C)
        "r": r,
        "rt": r.T,
    }


# ---------------------------------------------------------------------------
# Pure-JAX reference (for the correctness check)
# ---------------------------------------------------------------------------
def _ref_conv_bn_relu(x, w_t, bias, gamma, beta):
    w_hwio = jnp.transpose(w_t, (2, 3, 1, 0))
    y = jax.lax.conv_general_dilated(
        x, w_hwio, window_strides=(1, 1), padding="SAME",
        dimension_numbers=("NHWC", "HWIO", "NHWC"),
        precision=jax.lax.Precision.HIGHEST)
    y = y + bias.reshape(1, 1, 1, -1)
    mean = jnp.mean(y, axis=(0, 1, 2), keepdims=True)
    var = jnp.mean(jnp.square(y - mean), axis=(0, 1, 2), keepdims=True)
    y = (y - mean) * jax.lax.rsqrt(var + _EPS) * gamma.reshape(1, 1, 1, -1) \
        + beta.reshape(1, 1, 1, -1)
    return jnp.maximum(y, 0.0)


def _ref_forward(x_nchw, p):
    x = jnp.transpose(x_nchw, (0, 2, 3, 1))
    n, h, w, c = x.shape
    x = x.reshape(n, h // 2, 2, w // 2, 2, c).max(axis=(2, 4))
    x = _ref_conv_bn_relu(x, p["w1_t"], p["biases"][0], p["gammas"][0], p["betas"][0])
    x = _ref_conv_bn_relu(x, p["w2_t"], p["biases"][1], p["gammas"][1], p["betas"][1])
    x = _ref_conv_bn_relu(x, p["w2_t"], p["biases"][1], p["gammas"][2], p["betas"][2])
    return jnp.transpose(x, (0, 3, 1, 2))


# ---------------------------------------------------------------------------
if __name__ == "__main__":
    key = jax.random.PRNGKey(0)
    kx, kp = jax.random.split(key)

    N, C, H, W = 2, 16, 16, 16
    x = jax.random.normal(kx, (N, C, H, W), jnp.float32)
    params = init_params(kp, C)
    consts = prepare_kernel_consts(params, (N, C, H, W))

    fwd = jax.jit(single_top_view_pathway)
    out = jax.block_until_ready(fwd(x, consts))
    ref = jax.block_until_ready(_ref_forward(x, params))

    assert out.shape == (N, C, H // 2, W // 2), out.shape
    max_err = float(jnp.max(jnp.abs(out - ref)))
    if max_err > 1e-2:
        raise AssertionError(f"mismatch vs reference, max abs err = {max_err}")

    print("KERNEL_OK")
</pallas_src>

<mosaic_0001>
module attributes {stable_mosaic.version = 11 : i64} {
  func.func @_pathway_kernel(%arg0: memref<4x16x128xf32, #tpu.memory_space<vmem>>, %arg1: memref<3x128x128xf32, #tpu.memory_space<vmem>>, %arg2: memref<3x128x128xf32, #tpu.memory_space<vmem>>, %arg3: memref<3x16x16xf32, #tpu.memory_space<vmem>>, %arg4: memref<3x128xf32, #tpu.memory_space<vmem>>, %arg5: memref<3x128xf32, #tpu.memory_space<vmem>>, %arg6: memref<128x16xf32, #tpu.memory_space<vmem>>, %arg7: memref<16x128xf32, #tpu.memory_space<vmem>>, %arg8: memref<16x128xf32, #tpu.memory_space<vmem>>) attributes {dimension_semantics = [], scalar_prefetch = 0 : i64, scratch_operands = 0 : i64, tpu.core_type = #tpu.core_type<tc>} {
    %c0 = arith.constant 0 : index
    %c0_0 = arith.constant 0 : index
    %c0_1 = arith.constant 0 : index
    %0 = vector.load %arg0[%c0, %c0_0, %c0_1] : memref<4x16x128xf32, #tpu.memory_space<vmem>>, vector<1x16x128xf32>
    %1 = vector.shape_cast %0 : vector<1x16x128xf32> to vector<16x128xf32>
    %c1 = arith.constant 1 : index
    %c0_2 = arith.constant 0 : index
    %c0_3 = arith.constant 0 : index
    %2 = vector.load %arg0[%c1, %c0_2, %c0_3] : memref<4x16x128xf32, #tpu.memory_space<vmem>>, vector<1x16x128xf32>
    %3 = vector.shape_cast %2 : vector<1x16x128xf32> to vector<16x128xf32>
    %4 = arith.maximumf %1, %3 : vector<16x128xf32>
    %c2 = arith.constant 2 : index
    %c0_4 = arith.constant 0 : index
    %c0_5 = arith.constant 0 : index
    %5 = vector.load %arg0[%c2, %c0_4, %c0_5] : memref<4x16x128xf32, #tpu.memory_space<vmem>>, vector<1x16x128xf32>
    %6 = vector.shape_cast %5 : vector<1x16x128xf32> to vector<16x128xf32>
    %c3 = arith.constant 3 : index
    %c0_6 = arith.constant 0 : index
    %c0_7 = arith.constant 0 : index
    %7 = vector.load %arg0[%c3, %c0_6, %c0_7] : memref<4x16x128xf32, #tpu.memory_space<vmem>>, vector<1x16x128xf32>
    %8 = vector.shape_cast %7 : vector<1x16x128xf32> to vector<16x128xf32>
    %9 = arith.maximumf %6, %8 : vector<16x128xf32>
    %10 = arith.maximumf %4, %9 : vector<16x128xf32>
    %c0_8 = arith.constant 0 : index
    %c0_9 = arith.constant 0 : index
    %11 = vector.load %arg6[%c0_8, %c0_9] : memref<128x16xf32, #tpu.memory_space<vmem>>, vector<128x16xf32>
    %c0_10 = arith.constant 0 : index
    %c0_11 = arith.constant 0 : index
    %12 = vector.load %arg7[%c0_10, %c0_11] : memref<16x128xf32, #tpu.memory_space<vmem>>, vector<16x128xf32>
    %cst = arith.constant 0.000000e+00 : f32
    %13 = vector.broadcast %cst : f32 to vector<16x128xf32>
    %c0_12 = arith.constant 0 : index
    %c0_13 = arith.constant 0 : index
    %c0_14 = arith.constant 0 : index
    %14 = vector.load %arg3[%c0_12, %c0_13, %c0_14] : memref<3x16x16xf32, #tpu.memory_space<vmem>>, vector<1x16x16xf32>
    %15 = vector.shape_cast %14 : vector<1x16x16xf32> to vector<16x16xf32>
    %cst_15 = arith.constant dense<0.000000e+00> : vector<16x128xf32>
    %16 = tpu.matmul %15, %10, %cst_15 {dimension_numbers = #tpu.dot_dimension_numbers<[1], [0], [0], [1], [0, 0, 1, 1], [], []>} : vector<16x16xf32>, vector<16x128xf32>, vector<16x128xf32> -> vector<16x128xf32>
    %c0_16 = arith.constant 0 : index
    %c0_17 = arith.constant 0 : index
    %c0_18 = arith.constant 0 : index
    %17 = vector.load %arg1[%c0_16, %c0_17, %c0_18] : memref<3x128x128xf32, #tpu.memory_space<vmem>>, vector<1x128x128xf32>
    %18 = vector.shape_cast %17 : vector<1x128x128xf32> to vector<128x128xf32>
    %cst_19 = arith.constant dense<0.000000e+00> : vector<16x128xf32>
    %19 = tpu.matmul %16, %18, %cst_19 {dimension_numbers = #tpu.dot_dimension_numbers<[1], [0], [0], [1], [0, 0, 1, 1], [], []>} : vector<16x128xf32>, vector<128x128xf32>, vector<16x128xf32> -> vector<16x128xf32>
    %20 = arith.addf %13, %19 : vector<16x128xf32>
    %c1_20 = arith.constant 1 : index
    %c0_21 = arith.constant 0 : index
    %c0_22 = arith.constant 0 : index
    %21 = vector.load %arg3[%c1_20, %c0_21, %c0_22] : memref<3x16x16xf32, #tpu.memory_space<vmem>>, vector<1x16x16xf32>
    %22 = vector.shape_cast %21 : vector<1x16x16xf32> to vector<16x16xf32>
    %cst_23 = arith.constant dense<0.000000e+00> : vector<16x128xf32>
    %23 = tpu.matmul %22, %10, %cst_23 {dimension_numbers = #tpu.dot_dimension_numbers<[1], [0], [0], [1], [0, 0, 1, 1], [], []>} : vector<16x16xf32>, vector<16x128xf32>, vector<16x128xf32> -> vector<16x128xf32>
    %c1_24 = arith.constant 1 : index
    %c0_25 = arith.constant 0 : index
    %c0_26 = arith.constant 0 : index
    %24 = vector.load %arg1[%c1_24, %c0_25, %c0_26] : memref<3x128x128xf32, #tpu.memory_space<vmem>>, vector<1x128x128xf32>
    %25 = vector.shape_cast %24 : vector<1x128x128xf32> to vector<128x128xf32>
    %cst_27 = arith.constant dense<0.000000e+00> : vector<16x128xf32>
    %26 = tpu.matmul %23, %25, %cst_27 {dimension_numbers = #tpu.dot_dimension_numbers<[1], [0], [0], [1], [0, 0, 1, 1], [], []>} : vector<16x128xf32>, vector<128x128xf32>, vector<16x128xf32> -> vector<16x128xf32>
    %27 = arith.addf %20, %26 : vector<16x128xf32>
    %c2_28 = arith.constant 2 : index
    %c0_29 = arith.constant 0 : index
    %c0_30 = arith.constant 0 : index
    %28 = vector.load %arg3[%c2_28, %c0_29, %c0_30] : memref<3x16x16xf32, #tpu.memory_space<vmem>>, vector<1x16x16xf32>
    %29 = vector.shape_cast %28 : vector<1x16x16xf32> to vector<16x16xf32>
    %cst_31 = arith.constant dense<0.000000e+00> : vector<16x128xf32>
    %30 = tpu.matmul %29, %10, %cst_31 {dimension_numbers = #tpu.dot_dimension_numbers<[1], [0], [0], [1], [0, 0, 1, 1], [], []>} : vector<16x16xf32>, vector<16x128xf32>, vector<16x128xf32> -> vector<16x128xf32>
    %c2_32 = arith.constant 2 : index
    %c0_33 = arith.constant 0 : index
    %c0_34 = arith.constant 0 : index
    %31 = vector.load %arg1[%c2_32, %c0_33, %c0_34] : memref<3x128x128xf32, #tpu.memory_space<vmem>>, vector<1x128x128xf32>
    %32 = vector.shape_cast %31 : vector<1x128x128xf32> to vector<128x128xf32>
    %cst_35 = arith.constant dense<0.000000e+00> : vector<16x128xf32>
    %33 = tpu.matmul %30, %32, %cst_35 {dimension_numbers = #tpu.dot_dimension_numbers<[1], [0], [0], [1], [0, 0, 1, 1], [], []>} : vector<16x128xf32>, vector<128x128xf32>, vector<16x128xf32> -> vector<16x128xf32>
    %34 = arith.addf %27, %33 : vector<16x128xf32>
    %cst_36 = arith.constant dense<0.000000e+00> : vector<128xf32>
    %35 = vector.multi_reduction <add>, %34, %cst_36 [0] : vector<16x128xf32> to vector<128xf32>
    %36 = vector.shape_cast %35 : vector<128xf32> to vector<1x128xf32>
    %cst_37 = arith.constant dense<0.000000e+00> : vector<1x16xf32>
    %37 = tpu.matmul %36, %11, %cst_37 {dimension_numbers = #tpu.dot_dimension_numbers<[1], [0], [0], [1], [0, 0, 1, 1], [], []>} : vector<1x128xf32>, vector<128x16xf32>, vector<1x16xf32> -> vector<1x16xf32>
    %cst_38 = arith.constant 7.812500e-03 : f32
    %38 = vector.broadcast %cst_38 : f32 to vector<1x16xf32>
    %39 = arith.mulf %37, %38 : vector<1x16xf32>
    %cst_39 = arith.constant dense<0.000000e+00> : vector<1x128xf32>
    %40 = tpu.matmul %39, %12, %cst_39 {dimension_numbers = #tpu.dot_dimension_numbers<[1], [0], [0], [1], [0, 0, 1, 1], [], []>} : vector<1x16xf32>, vector<16x128xf32>, vector<1x128xf32> -> vector<1x128xf32>
    %41 = vector.broadcast %40 : vector<1x128xf32> to vector<16x128xf32>
    %42 = arith.subf %34, %41 : vector<16x128xf32>
    %43 = arith.mulf %42, %42 : vector<16x128xf32>
    %cst_40 = arith.constant dense<0.000000e+00> : vector<128xf32>
    %44 = vector.multi_reduction <add>, %43, %cst_40 [0] : vector<16x128xf32> to vector<128xf32>
    %45 = vector.shape_cast %44 : vector<128xf32> to vector<1x128xf32>
    %cst_41 = arith.constant dense<0.000000e+00> : vector<1x16xf32>
    %46 = tpu.matmul %45, %11, %cst_41 {dimension_numbers = #tpu.dot_dimension_numbers<[1], [0], [0], [1], [0, 0, 1, 1], [], []>} : vector<1x128xf32>, vector<128x16xf32>, vector<1x16xf32> -> vector<1x16xf32>
    %cst_42 = arith.constant 7.812500e-03 : f32
    %47 = vector.broadcast %cst_42 : f32 to vector<1x16xf32>
    %48 = arith.mulf %46, %47 : vector<1x16xf32>
    %cst_43 = arith.constant 9.99999974E-6 : f32
    %49 = vector.broadcast %cst_43 : f32 to vector<1x16xf32>
    %50 = arith.addf %48, %49 : vector<1x16xf32>
    %51 = math.rsqrt %50 : vector<1x16xf32>
    %cst_44 = arith.constant dense<0.000000e+00> : vector<1x128xf32>
    %52 = tpu.matmul %51, %12, %cst_44 {dimension_numbers = #tpu.dot_dimension_numbers<[1], [0], [0], [1], [0, 0, 1, 1], [], []>} : vector<1x16xf32>, vector<16x128xf32>, vector<1x128xf32> -> vector<1x128xf32>
    %53 = vector.broadcast %52 : vector<1x128xf32> to vector<16x128xf32>
    %54 = arith.mulf %42, %53 : vector<16x128xf32>
    %c0_45 = arith.constant 0 : index
    %c0_46 = arith.constant 0 : index
    %55 = vector.load %arg4[%c0_45, %c0_46] : memref<3x128xf32, #tpu.memory_space<vmem>>, vector<1x128xf32>
    %56 = vector.broadcast %55 : vector<1x128xf32> to vector<16x128xf32>
    %57 = arith.mulf %54, %56 : vector<16x128xf32>
    %c0_47 = arith.constant 0 : index
    %c0_48 = arith.constant 0 : index
    %58 = vector.load %arg5[%c0_47, %c0_48] : memref<3x128xf32, #tpu.memory_space<vmem>>, vector<1x128xf32>
    %59 = vector.broadcast %58 : vector<1x128xf32> to vector<16x128xf32>
    %60 = arith.addf %57, %59 : vector<16x128xf32>
    %cst_49 = arith.constant 0.000000e+00 : f32
    %61 = vector.broadcast %cst_49 : f32 to vector<16x128xf32>
    %62 = arith.maximumf %60, %61 : vector<16x128xf32>
    %cst_50 = arith.constant 0.000000e+00 : f32
    %63 = vector.broadcast %cst_50 : f32 to vector<16x128xf32>
    %c0_51 = arith.constant 0 : index
    %c0_52 = arith.constant 0 : index
    %c0_53 = arith.constant 0 : index
    %64 = vector.load %arg3[%c0_51, %c0_52, %c0_53] : memref<3x16x16xf32, #tpu.memory_space<vmem>>, vector<1x16x16xf32>
    %65 = vector.shape_cast %64 : vector<1x16x16xf32> to vector<16x16xf32>
    %cst_54 = arith.constant dense<0.000000e+00> : vector<16x128xf32>
    %66 = tpu.matmul %65, %62, %cst_54 {dimension_numbers = #tpu.dot_dimension_numbers<[1], [0], [0], [1], [0, 0, 1, 1], [], []>} : vector<16x16xf32>, vector<16x128xf32>, vector<16x128xf32> -> vector<16x128xf32>
    %c0_55 = arith.constant 0 : index
    %c0_56 = arith.constant 0 : index
    %c0_57 = arith.constant 0 : index
    %67 = vector.load %arg2[%c0_55, %c0_56, %c0_57] : memref<3x128x128xf32, #tpu.memory_space<vmem>>, vector<1x128x128xf32>
    %68 = vector.shape_cast %67 : vector<1x128x128xf32> to vector<128x128xf32>
    %cst_58 = arith.constant dense<0.000000e+00> : vector<16x128xf32>
    %69 = tpu.matmul %66, %68, %cst_58 {dimension_numbers = #tpu.dot_dimension_numbers<[1], [0], [0], [1], [0, 0, 1, 1], [], []>} : vector<16x128xf32>, vector<128x128xf32>, vector<16x128xf32> -> vector<16x128xf32>
    %70 = arith.addf %63, %69 : vector<16x128xf32>
    %c1_59 = arith.constant 1 : index
    %c0_60 = arith.constant 0 : index
    %c0_61 = arith.constant 0 : index
    %71 = vector.load %arg3[%c1_59, %c0_60, %c0_61] : memref<3x16x16xf32, #tpu.memory_space<vmem>>, vector<1x16x16xf32>
    %72 = vector.shape_cast %71 : vector<1x16x16xf32> to vector<16x16xf32>
    %cst_62 = arith.constant dense<0.000000e+00> : vector<16x128xf32>
    %73 = tpu.matmul %72, %62, %cst_62 {dimension_numbers = #tpu.dot_dimension_numbers<[1], [0], [0], [1], [0, 0, 1, 1], [], []>} : vector<16x16xf32>, vector<16x128xf32>, vector<16x128xf32> -> vector<16x128xf32>
    %c1_63 = arith.constant 1 : index
    %c0_64 = arith.constant 0 : index
    %c0_65 = arith.constant 0 : index
    %74 = vector.load %arg2[%c1_63, %c0_64, %c0_65] : memref<3x128x128xf32, #tpu.memory_space<vmem>>, vector<1x128x128xf32>
    %75 = vector.shape_cast %74 : vector<1x128x128xf32> to vector<128x128xf32>
    %cst_66 = arith.constant dense<0.000000e+00> : vector<16x128xf32>
    %76 = tpu.matmul %73, %75, %cst_66 {dimension_numbers = #tpu.dot_dimension_numbers<[1], [0], [0], [1], [0, 0, 1, 1], [], []>} : vector<16x128xf32>, vector<128x128xf32>, vector<16x128xf32> -> vector<16x128xf32>
    %77 = arith.addf %70, %76 : vector<16x128xf32>
    %c2_67 = arith.constant 2 : index
    %c0_68 = arith.constant 0 : index
    %c0_69 = arith.constant 0 : index
    %78 = vector.load %arg3[%c2_67, %c0_68, %c0_69] : memref<3x16x16xf32, #tpu.memory_space<vmem>>, vector<1x16x16xf32>
    %79 = vector.shape_cast %78 : vector<1x16x16xf32> to vector<16x16xf32>
    %cst_70 = arith.constant dense<0.000000e+00> : vector<16x128xf32>
    %80 = tpu.matmul %79, %62, %cst_70 {dimension_numbers = #tpu.dot_dimension_numbers<[1], [0], [0], [1], [0, 0, 1, 1], [], []>} : vector<16x16xf32>, vector<16x128xf32>, vector<16x128xf32> -> vector<16x128xf32>
    %c2_71 = arith.constant 2 : index
    %c0_72 = arith.constant 0 : index
    %c0_73 = arith.constant 0 : index
    %81 = vector.load %arg2[%c2_71, %c0_72, %c0_73] : memref<3x128x128xf32, #tpu.memory_space<vmem>>, vector<1x128x128xf32>
    %82 = vector.shape_cast %81 : vector<1x128x128xf32> to vector<128x128xf32>
    %cst_74 = arith.constant dense<0.000000e+00> : vector<16x128xf32>
    %83 = tpu.matmul %80, %82, %cst_74 {dimension_numbers = #tpu.dot_dimension_numbers<[1], [0], [0], [1], [0, 0, 1, 1], [], []>} : vector<16x128xf32>, vector<128x128xf32>, vector<16x128xf32> -> vector<16x128xf32>
    %84 = arith.addf %77, %83 : vector<16x128xf32>
    %cst_75 = arith.constant dense<0.000000e+00> : vector<128xf32>
    %85 = vector.multi_reduction <add>, %84, %cst_75 [0] : vector<16x128xf32> to vector<128xf32>
    %86 = vector.shape_cast %85 : vector<128xf32> to vector<1x128xf32>
    %cst_76 = arith.constant dense<0.000000e+00> : vector<1x16xf32>
    %87 = tpu.matmul %86, %11, %cst_76 {dimension_numbers = #tpu.dot_dimension_numbers<[1], [0], [0], [1], [0, 0, 1, 1], [], []>} : vector<1x128xf32>, vector<128x16xf32>, vector<1x16xf32> -> vector<1x16xf32>
    %cst_77 = arith.constant 7.812500e-03 : f32
    %88 = vector.broadcast %cst_77 : f32 to vector<1x16xf32>
    %89 = arith.mulf %87, %88 : vector<1x16xf32>
    %cst_78 = arith.constant dense<0.000000e+00> : vector<1x128xf32>
    %90 = tpu.matmul %89, %12, %cst_78 {dimension_numbers = #tpu.dot_dimension_numbers<[1], [0], [0], [1], [0, 0, 1, 1], [], []>} : vector<1x16xf32>, vector<16x128xf32>, vector<1x128xf32> -> vector<1x128xf32>
    %91 = vector.broadcast %90 : vector<1x128xf32> to vector<16x128xf32>
    %92 = arith.subf %84, %91 : vector<16x128xf32>
    %93 = arith.mulf %92, %92 : vector<16x128xf32>
    %cst_79 = arith.constant dense<0.000000e+00> : vector<128xf32>
    %94 = vector.multi_reduction <add>, %93, %cst_79 [0] : vector<16x128xf32> to vector<128xf32>
    %95 = vector.shape_cast %94 : vector<128xf32> to vector<1x128xf32>
    %cst_80 = arith.constant dense<0.000000e+00> : vector<1x16xf32>
    %96 = tpu.matmul %95, %11, %cst_80 {dimension_numbers = #tpu.dot_dimension_numbers<[1], [0], [0], [1], [0, 0, 1, 1], [], []>} : vector<1x128xf32>, vector<128x16xf32>, vector<1x16xf32> -> vector<1x16xf32>
    %cst_81 = arith.constant 7.812500e-03 : f32
    %97 = vector.broadcast %cst_81 : f32 to vector<1x16xf32>
    %98 = arith.mulf %96, %97 : vector<1x16xf32>
    %cst_82 = arith.constant 9.99999974E-6 : f32
    %99 = vector.broadcast %cst_82 : f32 to vector<1x16xf32>
    %100 = arith.addf %98, %99 : vector<1x16xf32>
    %101 = math.rsqrt %100 : vector<1x16xf32>
    %cst_83 = arith.constant dense<0.000000e+00> : vector<1x128xf32>
    %102 = tpu.matmul %101, %12, %cst_83 {dimension_numbers = #tpu.dot_dimension_numbers<[1], [0], [0], [1], [0, 0, 1, 1], [], []>} : vector<1x16xf32>, vector<16x128xf32>, vector<1x128xf32> -> vector<1x128xf32>
    %103 = vector.broadcast %102 : vector<1x128xf32> to vector<16x128xf32>
    %104 = arith.mulf %92, %103 : vector<16x128xf32>
    %c1_84 = arith.constant 1 : index
    %c0_85 = arith.constant 0 : index
    %105 = vector.load %arg4[%c1_84, %c0_85] : memref<3x128xf32, #tpu.memory_space<vmem>>, vector<1x128xf32>
    %106 = vector.broadcast %105 : vector<1x128xf32> to vector<16x128xf32>
    %107 = arith.mulf %104, %106 : vector<16x128xf32>
    %c1_86 = arith.constant 1 : index
    %c0_87 = arith.constant 0 : index
    %108 = vector.load %arg5[%c1_86, %c0_87] : memref<3x128xf32, #tpu.memory_space<vmem>>, vector<1x128xf32>
    %109 = vector.broadcast %108 : vector<1x128xf32> to vector<16x128xf32>
    %110 = arith.addf %107, %109 : vector<16x128xf32>
    %cst_88 = arith.constant 0.000000e+00 : f32
    %111 = vector.broadcast %cst_88 : f32 to vector<16x128xf32>
    %112 = arith.maximumf %110, %111 : vector<16x128xf32>
    %cst_89 = arith.constant 0.000000e+00 : f32
    %113 = vector.broadcast %cst_89 : f32 to vector<16x128xf32>
    %c0_90 = arith.constant 0 : index
    %c0_91 = arith.constant 0 : index
    %c0_92 = arith.constant 0 : index
    %114 = vector.load %arg3[%c0_90, %c0_91, %c0_92] : memref<3x16x16xf32, #tpu.memory_space<vmem>>, vector<1x16x16xf32>
    %115 = vector.shape_cast %114 : vector<1x16x16xf32> to vector<16x16xf32>
    %cst_93 = arith.constant dense<0.000000e+00> : vector<16x128xf32>
    %116 = tpu.matmul %115, %112, %cst_93 {dimension_numbers = #tpu.dot_dimension_numbers<[1], [0], [0], [1], [0, 0, 1, 1], [], []>} : vector<16x16xf32>, vector<16x128xf32>, vector<16x128xf32> -> vector<16x128xf32>
    %c0_94 = arith.constant 0 : index
    %c0_95 = arith.constant 0 : index
    %c0_96 = arith.constant 0 : index
    %117 = vector.load %arg2[%c0_94, %c0_95, %c0_96] : memref<3x128x128xf32, #tpu.memory_space<vmem>>, vector<1x128x128xf32>
    %118 = vector.shape_cast %117 : vector<1x128x128xf32> to vector<128x128xf32>
    %cst_97 = arith.constant dense<0.000000e+00> : vector<16x128xf32>
    %119 = tpu.matmul %116, %118, %cst_97 {dimension_numbers = #tpu.dot_dimension_numbers<[1], [0], [0], [1], [0, 0, 1, 1], [], []>} : vector<16x128xf32>, vector<128x128xf32>, vector<16x128xf32> -> vector<16x128xf32>
    %120 = arith.addf %113, %119 : vector<16x128xf32>
    %c1_98 = arith.constant 1 : index
    %c0_99 = arith.constant 0 : index
    %c0_100 = arith.constant 0 : index
    %121 = vector.load %arg3[%c1_98, %c0_99, %c0_100] : memref<3x16x16xf32, #tpu.memory_space<vmem>>, vector<1x16x16xf32>
    %122 = vector.shape_cast %121 : vector<1x16x16xf32> to vector<16x16xf32>
    %cst_101 = arith.constant dense<0.000000e+00> : vector<16x128xf32>
    %123 = tpu.matmul %122, %112, %cst_101 {dimension_numbers = #tpu.dot_dimension_numbers<[1], [0], [0], [1], [0, 0, 1, 1], [], []>} : vector<16x16xf32>, vector<16x128xf32>, vector<16x128xf32> -> vector<16x128xf32>
    %c1_102 = arith.constant 1 : index
    %c0_103 = arith.constant 0 : index
    %c0_104 = arith.constant 0 : index
    %124 = vector.load %arg2[%c1_102, %c0_103, %c0_104] : memref<3x128x128xf32, #tpu.memory_space<vmem>>, vector<1x128x128xf32>
    %125 = vector.shape_cast %124 : vector<1x128x128xf32> to vector<128x128xf32>
    %cst_105 = arith.constant dense<0.000000e+00> : vector<16x128xf32>
    %126 = tpu.matmul %123, %125, %cst_105 {dimension_numbers = #tpu.dot_dimension_numbers<[1], [0], [0], [1], [0, 0, 1, 1], [], []>} : vector<16x128xf32>, vector<128x128xf32>, vector<16x128xf32> -> vector<16x128xf32>
    %127 = arith.addf %120, %126 : vector<16x128xf32>
    %c2_106 = arith.constant 2 : index
    %c0_107 = arith.constant 0 : index
    %c0_108 = arith.constant 0 : index
    %128 = vector.load %arg3[%c2_106, %c0_107, %c0_108] : memref<3x16x16xf32, #tpu.memory_space<vmem>>, vector<1x16x16xf32>
    %129 = vector.shape_cast %128 : vector<1x16x16xf32> to vector<16x16xf32>
    %cst_109 = arith.constant dense<0.000000e+00> : vector<16x128xf32>
    %130 = tpu.matmul %129, %112, %cst_109 {dimension_numbers = #tpu.dot_dimension_numbers<[1], [0], [0], [1], [0, 0, 1, 1], [], []>} : vector<16x16xf32>, vector<16x128xf32>, vector<16x128xf32> -> vector<16x128xf32>
    %c2_110 = arith.constant 2 : index
    %c0_111 = arith.constant 0 : index
    %c0_112 = arith.constant 0 : index
    %131 = vector.load %arg2[%c2_110, %c0_111, %c0_112] : memref<3x128x128xf32, #tpu.memory_space<vmem>>, vector<1x128x128xf32>
    %132 = vector.shape_cast %131 : vector<1x128x128xf32> to vector<128x128xf32>
    %cst_113 = arith.constant dense<0.000000e+00> : vector<16x128xf32>
    %133 = tpu.matmul %130, %132, %cst_113 {dimension_numbers = #tpu.dot_dimension_numbers<[1], [0], [0], [1], [0, 0, 1, 1], [], []>} : vector<16x128xf32>, vector<128x128xf32>, vector<16x128xf32> -> vector<16x128xf32>
    %134 = arith.addf %127, %133 : vector<16x128xf32>
    %cst_114 = arith.constant dense<0.000000e+00> : vector<128xf32>
    %135 = vector.multi_reduction <add>, %134, %cst_114 [0] : vector<16x128xf32> to vector<128xf32>
    %136 = vector.shape_cast %135 : vector<128xf32> to vector<1x128xf32>
    %cst_115 = arith.constant dense<0.000000e+00> : vector<1x16xf32>
    %137 = tpu.matmul %136, %11, %cst_115 {dimension_numbers = #tpu.dot_dimension_numbers<[1], [0], [0], [1], [0, 0, 1, 1], [], []>} : vector<1x128xf32>, vector<128x16xf32>, vector<1x16xf32> -> vector<1x16xf32>
    %cst_116 = arith.constant 7.812500e-03 : f32
    %138 = vector.broadcast %cst_116 : f32 to vector<1x16xf32>
    %139 = arith.mulf %137, %138 : vector<1x16xf32>
    %cst_117 = arith.constant dense<0.000000e+00> : vector<1x128xf32>
    %140 = tpu.matmul %139, %12, %cst_117 {dimension_numbers = #tpu.dot_dimension_numbers<[1], [0], [0], [1], [0, 0, 1, 1], [], []>} : vector<1x16xf32>, vector<16x128xf32>, vector<1x128xf32> -> vector<1x128xf32>
    %141 = vector.broadcast %140 : vector<1x128xf32> to vector<16x128xf32>
    %142 = arith.subf %134, %141 : vector<16x128xf32>
    %143 = arith.mulf %142, %142 : vector<16x128xf32>
    %cst_118 = arith.constant dense<0.000000e+00> : vector<128xf32>
    %144 = vector.multi_reduction <add>, %143, %cst_118 [0] : vector<16x128xf32> to vector<128xf32>
    %145 = vector.shape_cast %144 : vector<128xf32> to vector<1x128xf32>
    %cst_119 = arith.constant dense<0.000000e+00> : vector<1x16xf32>
    %146 = tpu.matmul %145, %11, %cst_119 {dimension_numbers = #tpu.dot_dimension_numbers<[1], [0], [0], [1], [0, 0, 1, 1], [], []>} : vector<1x128xf32>, vector<128x16xf32>, vector<1x16xf32> -> vector<1x16xf32>
    %cst_120 = arith.constant 7.812500e-03 : f32
    %147 = vector.broadcast %cst_120 : f32 to vector<1x16xf32>
    %148 = arith.mulf %146, %147 : vector<1x16xf32>
    %cst_121 = arith.constant 9.99999974E-6 : f32
    %149 = vector.broadcast %cst_121 : f32 to vector<1x16xf32>
    %150 = arith.addf %148, %149 : vector<1x16xf32>
    %151 = math.rsqrt %150 : vector<1x16xf32>
    %cst_122 = arith.constant dense<0.000000e+00> : vector<1x128xf32>
    %152 = tpu.matmul %151, %12, %cst_122 {dimension_numbers = #tpu.dot_dimension_numbers<[1], [0], [0], [1], [0, 0, 1, 1], [], []>} : vector<1x16xf32>, vector<16x128xf32>, vector<1x128xf32> -> vector<1x128xf32>
    %153 = vector.broadcast %152 : vector<1x128xf32> to vector<16x128xf32>
    %154 = arith.mulf %142, %153 : vector<16x128xf32>
    %c2_123 = arith.constant 2 : index
    %c0_124 = arith.constant 0 : index
    %155 = vector.load %arg4[%c2_123, %c0_124] : memref<3x128xf32, #tpu.memory_space<vmem>>, vector<1x128xf32>
    %156 = vector.broadcast %155 : vector<1x128xf32> to vector<16x128xf32>
    %157 = arith.mulf %154, %156 : vector<16x128xf32>
    %c2_125 = arith.constant 2 : index
    %c0_126 = arith.constant 0 : index
    %158 = vector.load %arg5[%c2_125, %c0_126] : memref<3x128xf32, #tpu.memory_space<vmem>>, vector<1x128xf32>
    %159 = vector.broadcast %158 : vector<1x128xf32> to vector<16x128xf32>
    %160 = arith.addf %157, %159 : vector<16x128xf32>
    %cst_127 = arith.constant 0.000000e+00 : f32
    %161 = vector.broadcast %cst_127 : f32 to vector<16x128xf32>
    %162 = arith.maximumf %160, %161 : vector<16x128xf32>
    %c0_128 = arith.constant 0 : index
    %c0_129 = arith.constant 0 : index
    %163 = vector.load %arg8[%c0_128, %c0_129] : memref<16x128xf32, #tpu.memory_space<vmem>>, vector<16x128xf32>
    tpu.vector_store %arg8[%c0_128, %c0_129], %162 {strides = array<i32>} : memref<16x128xf32, #tpu.memory_space<vmem>>, vector<16x128xf32>,
    return
  }
}

</mosaic_0001>

<llo_original>
// kernel: single_top_view_pathway.1
$region0: #{single_top_view_pathway.1}
  #allocation0 [shape = 'u32[]', space=smem, size = 0x4, offset = 0x4, fixed_abs, tag = 'smem constant byte address 0x4 - core index']
  #allocation1 [shape = 'u32[144,128]{1,0:T(1,128)}', space=vmem, size = 0x12000, scoped, tag = 'internal scratch']
  %s0 = inlined_call_operand.vmem [shape: f32[4,16,128], index: 0, kind: input, shape index: {}]
  %s1 = inlined_call_operand.vmem [shape: f32[3,128,128], index: 1, kind: input, shape index: {}]
  %s2 = inlined_call_operand.vmem [shape: f32[3,128,128], index: 2, kind: input, shape index: {}]
  %s3 = inlined_call_operand.vmem [shape: f32[3,16,16], index: 3, kind: input, shape index: {}]
  %s4 = inlined_call_operand.vmem [shape: f32[3,128], index: 4, kind: input, shape index: {}]
  %s5 = inlined_call_operand.vmem [shape: f32[3,128], index: 5, kind: input, shape index: {}]
  %s6 = inlined_call_operand.vmem [shape: f32[128,16], index: 6, kind: input, shape index: {}]
  %s7 = inlined_call_operand.vmem [shape: f32[16,128], index: 7, kind: input, shape index: {}]
  %s8 = inlined_call_operand.vmem [shape: f32[16,128], index: 8, kind: output, shape index: {}]
  %s9 = sld [smem:[#allocation0]]
  $region42: #{single_top_view_pathway.1} parent=0
    _
  %s11 = ssub.s32 1, %s9
  %s12 = scalar_select 0, %s11, %s9
  // Predicated region
  $region2: #{single_top_view_pathway.1} parent=0 // pred_check
    _
  $region3: #{single_top_view_pathway.1} parent=0 // pred_check_branch
    %14 = sbr.rel (0) target = $region5
  $region4: #{single_top_view_pathway.1} parent=0 // pred_region
    _
  $region5: #{single_top_view_pathway.1} parent=0 // pred_fallthru
    _
  // Predicated region
  $region6: #{single_top_view_pathway.1} parent=0 // pred_check
    _
  $region7: #{single_top_view_pathway.1} parent=0 // pred_check_branch
    %16 = sbr.rel (0) target = $region9
  $region8: #{single_top_view_pathway.1} parent=0 // pred_region
    _
  $region9: #{single_top_view_pathway.1} parent=0 // pred_fallthru
    _
  // Predicated region
  $region10: #{single_top_view_pathway.1} parent=0 // pred_check
    _
  $region11: #{single_top_view_pathway.1} parent=0 // pred_check_branch
    %18 = sbr.rel (0) target = $region13
  $region12: #{single_top_view_pathway.1} parent=0 // pred_region
    _
  $region13: #{single_top_view_pathway.1} parent=0 // pred_fallthru
    _
  // Predicated region
  $region14: #{single_top_view_pathway.1} parent=0 // pred_check
    _
  $region15: #{single_top_view_pathway.1} parent=0 // pred_check_branch
    %20 = sbr.rel (0) target = $region17
  $region16: #{single_top_view_pathway.1} parent=0 // pred_region
    _
  $region17: #{single_top_view_pathway.1} parent=0 // pred_fallthru
    _
  // Predicated region
  $region18: #{single_top_view_pathway.1} parent=0 // pred_check
    _
  $region19: #{single_top_view_pathway.1} parent=0 // pred_check_branch
    %22 = sbr.rel (0) target = $region21
  $region20: #{single_top_view_pathway.1} parent=0 // pred_region
    _
  $region21: #{single_top_view_pathway.1} parent=0 // pred_fallthru
    _
  // Predicated region
  $region22: #{single_top_view_pathway.1} parent=0 // pred_check
    _
  $region23: #{single_top_view_pathway.1} parent=0 // pred_check_branch
    %24 = sbr.rel (0) target = $region25
  $region24: #{single_top_view_pathway.1} parent=0 // pred_region
    _
  $region25: #{single_top_view_pathway.1} parent=0 // pred_fallthru
    _
  // Predicated region
  $region26: #{single_top_view_pathway.1} parent=0 // pred_check
    _
  $region27: #{single_top_view_pathway.1} parent=0 // pred_check_branch
    %26 = sbr.rel (0) target = $region29
  $region28: #{single_top_view_pathway.1} parent=0 // pred_region
    _
  $region29: #{single_top_view_pathway.1} parent=0 // pred_fallthru
    _
  // Predicated region
  $region30: #{single_top_view_pathway.1} parent=0 // pred_check
    _
  $region31: #{single_top_view_pathway.1} parent=0 // pred_check_branch
    %28 = sbr.rel (0) target = $region33
  $region32: #{single_top_view_pathway.1} parent=0 // pred_region
    _
  $region33: #{single_top_view_pathway.1} parent=0 // pred_fallthru
    _
  %v29 = vld [vmem:[%s0] sm:$0xff]
  %v30 = vld [vmem:[%s0 + $0x8] sm:$0xff]
  %s31 = scalar_lea.vmem %s0, 16
  %v32 = vld [vmem:[%s31] sm:$0xff]
  %v33 = vld [vmem:[%s31 + $0x8] sm:$0xff]
  %v34 = vmax.f32 %v29, %v32
  %v35 = vmax.f32 %v30, %v33
  %s36 = scalar_lea.vmem %s0, 32
  %v37 = vld [vmem:[%s36] sm:$0xff]
  %v38 = vld [vmem:[%s36 + $0x8] sm:$0xff]
  %s39 = scalar_lea.vmem %s0, 48
  %v40 = vld [vmem:[%s39] sm:$0xff]
  %v41 = vld [vmem:[%s39 + $0x8] sm:$0xff]
  %v42 = vmax.f32 %v37, %v40
  %v43 = vmax.f32 %v38, %v41
  %v44 = vmax.f32 %v34, %v42
  %v45 = vmax.f32 %v35, %v43
  %v46 = vld [vmem:[%s6] sm:$0xff]
  %v47 = vld [vmem:[%s6 + $0x8] sm:$0xff]
  %v48 = vld [vmem:[%s6 + $0x10] sm:$0xff]
  %v49 = vld [vmem:[%s6 + $0x18] sm:$0xff]
  %v50 = vld [vmem:[%s6 + $0x20] sm:$0xff]
  %v51 = vld [vmem:[%s6 + $0x28] sm:$0xff]
  %v52 = vld [vmem:[%s6 + $0x30] sm:$0xff]
  %v53 = vld [vmem:[%s6 + $0x38] sm:$0xff]
  %v54 = vld [vmem:[%s6 + $0x40] sm:$0xff]
  %v55 = vld [vmem:[%s6 + $0x48] sm:$0xff]
  %v56 = vld [vmem:[%s6 + $0x50] sm:$0xff]
  %v57 = vld [vmem:[%s6 + $0x58] sm:$0xff]
  %v58 = vld [vmem:[%s6 + $0x60] sm:$0xff]
  %v59 = vld [vmem:[%s6 + $0x68] sm:$0xff]
  %v60 = vld [vmem:[%s6 + $0x70] sm:$0xff]
  %v61 = vld [vmem:[%s6 + $0x78] sm:$0xff]
  %v62 = vld [vmem:[%s7] sm:$0xff]
  %v63 = vld [vmem:[%s7 + $0x8] sm:$0xff]
  %v64 = vld [vmem:[%s3] sm:$0xff]
  %v65 = vld [vmem:[%s3 + $0x8] sm:$0xff]
  %vm66 = vcmask 130048
  %v68 = vsel %vm66, %v64, 0
  %v71 = vsel %vm66, %v65, 0
  %73 = vmatprep.subr.mxu0 0.0
  %74 = vmatpush1.msra.mxu0 %v44
  %75 = vmatprep.subr.mxu0 0.0
  %76 = vmatpush1.msra.mxu0 %v45
  %77 = vmatprep.subr.mxu0 0.0
  %78 = vmatpush1.msra.mxu0 0.0
  %79 = vmatprep.subr.mxu0 0.0
  %80 = vmatpush1.msra.mxu0 0.0
  %81 = vmatprep.subr.mxu0 0.0
  %82 = vmatpush1.msra.mxu0 0.0
  %83 = vmatprep.subr.mxu0 0.0
  %84 = vmatpush1.msra.mxu0 0.0
  %85 = vmatprep.subr.mxu0 0.0
  %86 = vmatpush1.msra.mxu0 0.0
  %87 = vmatprep.subr.mxu0 0.0
  %88 = vmatpush1.msra.mxu0 0.0
  %89 = vmatprep.subr.mxu0 0.0
  %90 = vmatpush1.msra.mxu0 0.0
  %91 = vmatprep.subr.mxu0 0.0
  %92 = vmatpush1.msra.mxu0 0.0
  %93 = vmatprep.subr.mxu0 0.0
  %94 = vmatpush1.msra.mxu0 0.0
  %95 = vmatprep.subr.mxu0 0.0
  %96 = vmatpush1.msra.mxu0 0.0
  %97 = vmatprep.subr.mxu0 0.0
  %98 = vmatpush1.msra.mxu0 0.0
  %99 = vmatprep.subr.mxu0 0.0
  %100 = vmatpush1.msra.mxu0 0.0
  %101 = vmatprep.subr.mxu0 0.0
  %102 = vmatpush1.msra.mxu0 0.0
  %103 = vmatprep.subr.mxu0 0.0
  %104 = vmatpush1.msra.mxu0 0.0
  %105 = vmatprep.subr.mxu0 0.0
  %106 = vmatpush1.msra.mxu0 0.0
  %107 = vmatprep.subr.mxu0 0.0
  %108 = vmatpush1.msra.mxu0 0.0
  %109 = vmatprep.subr.mxu0 0.0
  %110 = vmatpush1.msra.mxu0 0.0
  %111 = vmatprep.subr.mxu0 0.0
  %112 = vmatpush1.msra.mxu0 0.0
  %113 = vmatprep.subr.mxu0 0.0
  %114 = vmatpush1.msra.mxu0 0.0
  %115 = vmatprep.subr.mxu0 0.0
  %116 = vmatpush1.msra.mxu0 0.0
  %117 = vmatprep.subr.mxu0 0.0
  %118 = vmatpush1.msra.mxu0 0.0
  %119 = vmatprep.subr.mxu0 0.0
  %120 = vmatpush1.msra.mxu0 0.0
  %121 = vmatprep.subr.mxu0 0.0
  %122 = vmatpush1.msra.mxu0 0.0
  %123 = vmatprep.subr.mxu0 0.0
  %124 = vmatpush1.msra.mxu0 0.0
  %125 = vmatprep.subr.mxu0 0.0
  %126 = vmatpush1.msra.mxu0 0.0
  %127 = vmatprep.subr.mxu0 0.0
  %128 = vmatpush1.msra.mxu0 0.0
  %129 = vmatprep.subr.mxu0 0.0
  %130 = vmatpush1.msra.mxu0 0.0
  %131 = vmatprep.subr.mxu0 0.0
  %132 = vmatpush1.msra.mxu0 0.0
  %133 = vmatprep.subr.mxu0 0.0
  %134 = vmatpush1.msra.mxu0 0.0
  %135 = vmatprep.subr.mxu0 0.0
  %136 = vmatpush1.msra.mxu0 0.0
  %137 = vmatprep.mubr.f32.mxu0 0.0
  %138 = vmatmul.mubr.f32.gmra.mrb[0].mxu0 %v68
  %v139 = vpop.f32.mrb[0].mxu0
  %v140 = vadd.f32 0.0, %v139
  %v141 = vpop.f32.mrb[0].mxu0
  %142 = vmatprep.mubr.f32.mxu0 0.0
  %143 = vmatmul.mubr.f32.gmra.mrb[0].mxu0 %v71
  %v144 = vpop.f32.mrb[0].mxu0
  %v145 = vadd.f32 0.0, %v144
  %v146 = vpop.f32.mrb[0].mxu0
  %147 = vdwg.mxu0
  %v148 = vld [vmem:[%s1] sm:$0xff]
  %v149 = vld [vmem:[%s1 + $0x8] sm:$0xff]
  %v150 = vld [vmem:[%s1 + $0x10] sm:$0xff]
  %v151 = vld [vmem:[%s1 + $0x18] sm:$0xff]
  %v152 = vld [vmem:[%s1 + $0x20] sm:$0xff]
  %v153 = vld [vmem:[%s1 + $0x28] sm:$0xff]
  %v154 = vld [vmem:[%s1 + $0x30] sm:$0xff]
  %v155 = vld [vmem:[%s1 + $0x38] sm:$0xff]
  %v156 = vld [vmem:[%s1 + $0x40] sm:$0xff]
  %v157 = vld [vmem:[%s1 + $0x48] sm:$0xff]
  %v158 = vld [vmem:[%s1 + $0x50] sm:$0xff]
  %v159 = vld [vmem:[%s1 + $0x58] sm:$0xff]
  %v160 = vld [vmem:[%s1 + $0x60] sm:$0xff]
  %v161 = vld [vmem:[%s1 + $0x68] sm:$0xff]
  %v162 = vld [vmem:[%s1 + $0x70] sm:$0xff]
  %v163 = vld [vmem:[%s1 + $0x78] sm:$0xff]
  %s164 = scalar_lea.vmem %s3, 16
  %v165 = vld [vmem:[%s164] sm:$0xff]
  %v166 = vld [vmem:[%s164 + $0x8] sm:$0xff]
  %v168 = vsel %vm66, %v165, 0
  %v171 = vsel %vm66, %v166, 0
  %173 = vmatprep.subr.mxu0 0.0
  %174 = vmatpush1.msra.mxu0 %v44
  %175 = vmatprep.subr.mxu0 0.0
  %176 = vmatpush1.msra.mxu0 %v45
  %177 = vmatprep.subr.mxu0 0.0
  %178 = vmatpush1.msra.mxu0 0.0
  %179 = vmatprep.subr.mxu0 0.0
  %180 = vmatpush1.msra.mxu0 0.0
  %181 = vmatprep.subr.mxu0 0.0
  %182 = vmatpush1.msra.mxu0 0.0
  %183 = vmatprep.subr.mxu0 0.0
  %184 = vmatpush1.msra.mxu0 0.0
  %185 = vmatprep.subr.mxu0 0.0
  %186 = vmatpush1.msra.mxu0 0.0
  %187 = vmatprep.subr.mxu0 0.0
  %188 = vmatpush1.msra.mxu0 0.0
  %189 = vmatprep.subr.mxu0 0.0
  %190 = vmatpush1.msra.mxu0 0.0
  %191 = vmatprep.subr.mxu0 0.0
  %192 = vmatpush1.msra.mxu0 0.0
  %193 = vmatprep.subr.mxu0 0.0
  %194 = vmatpush1.msra.mxu0 0.0
  %195 = vmatprep.subr.mxu0 0.0
  %196 = vmatpush1.msra.mxu0 0.0
  %197 = vmatprep.subr.mxu0 0.0
  %198 = vmatpush1.msra.mxu0 0.0
  %199 = vmatprep.subr.mxu0 0.0
  %200 = vmatpush1.msra.mxu0 0.0
  %201 = vmatprep.subr.mxu0 0.0
  %202 = vmatpush1.msra.mxu0 0.0
  %203 = vmatprep.subr.mxu0 0.0
  %204 = vmatpush1.msra.mxu0 0.0
  %205 = vmatprep.subr.mxu0 0.0
  %206 = vmatpush1.msra.mxu0 0.0
  %207 = vmatprep.subr.mxu0 0.0
  %208 = vmatpush1.msra.mxu0 0.0
  %209 = vmatprep.subr.mxu0 0.0
  %210 = vmatpush1.msra.mxu0 0.0
  %211 = vmatprep.subr.mxu0 0.0
  %212 = vmatpush1.msra.mxu0 0.0
  %213 = vmatprep.subr.mxu0 0.0
  %214 = vmatpush1.msra.mxu0 0.0
  %215 = vmatprep.subr.mxu0 0.0
  %216 = vmatpush1.msra.mxu0 0.0
  %217 = vmatprep.subr.mxu0 0.0
  %218 = vmatpush1.msra.mxu0 0.0
  %219 = vmatprep.subr.mxu0 0.0
  %220 = vmatpush1.msra.mxu0 0.0
  %221 = vmatprep.subr.mxu0 0.0
  %222 = vmatpush1.msra.mxu0 0.0
  %223 = vmatprep.subr.mxu0 0.0
  %224 = vmatpush1.msra.mxu0 0.0
  %225 = vmatprep.subr.mxu0 0.0
  %226 = vmatpush1.msra.mxu0 0.0
  %227 = vmatprep.subr.mxu0 0.0
  %228 = vmatpush1.msra.mxu0 0.0
  %229 = vmatprep.subr.mxu0 0.0
  %230 = vmatpush1.msra.mxu0 0.0
  %231 = vmatprep.subr.mxu0 0.0
  %232 = vmatpush1.msra.mxu0 0.0
  %233 = vmatprep.subr.mxu0 0.0
  %234 = vmatpush1.msra.mxu0 0.0
  %235 = vmatprep.subr.mxu0 0.0
  %236 = vmatpush1.msra.mxu0 0.0
  %237 = vmatprep.mubr.f32.mxu0 0.0
  %238 = vmatmul.mubr.f32.gmra.mrb[0].mxu0 %v168
  %v239 = vpop.f32.mrb[0].mxu0
  %v240 = vadd.f32 0.0, %v239
  %v241 = vpop.f32.mrb[0].mxu0
  %242 = vmatprep.mubr.f32.mxu0 0.0
  %243 = vmatmul.mubr.f32.gmra.mrb[0].mxu0 %v171
  %v244 = vpop.f32.mrb[0].mxu0
  %v245 = vadd.f32 0.0, %v244
  %v246 = vpop.f32.mrb[0].mxu0
  %247 = vdwg.mxu0
  %s248 = scalar_lea.vmem %s1, 128
  %v249 = vld [vmem:[%s248] sm:$0xff]
  %v250 = vld [vmem:[%s248 + $0x8] sm:$0xff]
  %v251 = vld [vmem:[%s248 + $0x10] sm:$0xff]
  %v252 = vld [vmem:[%s248 + $0x18] sm:$0xff]
  %v253 = vld [vmem:[%s248 + $0x20] sm:$0xff]
  %v254 = vld [vmem:[%s248 + $0x28] sm:$0xff]
  %v255 = vld [vmem:[%s248 + $0x30] sm:$0xff]
  %v256 = vld [vmem:[%s248 + $0x38] sm:$0xff]
  %v257 = vld [vmem:[%s248 + $0x40] sm:$0xff]
  %v258 = vld [vmem:[%s248 + $0x48] sm:$0xff]
  %v259 = vld [vmem:[%s248 + $0x50] sm:$0xff]
  %v260 = vld [vmem:[%s248 + $0x58] sm:$0xff]
  %v261 = vld [vmem:[%s248 + $0x60] sm:$0xff]
  %v262 = vld [vmem:[%s248 + $0x68] sm:$0xff]
  %v263 = vld [vmem:[%s248 + $0x70] sm:$0xff]
  %v264 = vld [vmem:[%s248 + $0x78] sm:$0xff]
  %265 = vmatprep.subr.mxu0 0.0
  %266 = vmatpush1.msra.mxu0 %v249
  %267 = vmatprep.subr.mxu0 0.0
  %268 = vmatpush1.msra.mxu0 %v250
  %269 = vmatprep.subr.mxu0 0.0
  %270 = vmatpush1.msra.mxu0 %v251
  %271 = vmatprep.subr.mxu0 0.0
  %272 = vmatpush1.msra.mxu0 %v252
  %273 = vmatprep.subr.mxu0 0.0
  %274 = vmatpush1.msra.mxu0 %v253
  %275 = vmatprep.subr.mxu0 0.0
  %276 = vmatpush1.msra.mxu0 %v254
  %277 = vmatprep.subr.mxu0 0.0
  %278 = vmatpush1.msra.mxu0 %v255
  %279 = vmatprep.subr.mxu0 0.0
  %280 = vmatpush1.msra.mxu0 %v256
  %281 = vmatprep.subr.mxu0 0.0
  %282 = vmatpush1.msra.mxu0 %v257
  %283 = vmatprep.subr.mxu0 0.0
  %284 = vmatpush1.msra.mxu0 %v258
  %285 = vmatprep.subr.mxu0 0.0
  %286 = vmatpush1.msra.mxu0 %v259
  %287 = vmatprep.subr.mxu0 0.0
  %288 = vmatpush1.msra.mxu0 %v260
  %289 = vmatprep.subr.mxu0 0.0
  %290 = vmatpush1.msra.mxu0 %v261
  %291 = vmatprep.subr.mxu0 0.0
  %292 = vmatpush1.msra.mxu0 %v262
  %293 = vmatprep.subr.mxu0 0.0
  %294 = vmatpush1.msra.mxu0 %v263
  %295 = vmatprep.subr.mxu0 0.0
  %296 = vmatpush1.msra.mxu0 %v264
  %297 = vmatprep.subr.mxu0 0.0
  %298 = vmatpush1.msra.mxu0 0.0
  %299 = vmatprep.subr.mxu0 0.0
  %300 = vmatpush1.msra.mxu0 0.0
  %301 = vmatprep.subr.mxu0 0.0
  %302 = vmatpush1.msra.mxu0 0.0
  %303 = vmatprep.subr.mxu0 0.0
  %304 = vmatpush1.msra.mxu0 0.0
  %305 = vmatprep.subr.mxu0 0.0
  %306 = vmatpush1.msra.mxu0 0.0
  %307 = vmatprep.subr.mxu0 0.0
  %308 = vmatpush1.msra.mxu0 0.0
  %309 = vmatprep.subr.mxu0 0.0
  %310 = vmatpush1.msra.mxu0 0.0
  %311 = vmatprep.subr.mxu0 0.0
  %312 = vmatpush1.msra.mxu0 0.0
  %313 = vmatprep.subr.mxu0 0.0
  %314 = vmatpush1.msra.mxu0 0.0
  %315 = vmatprep.subr.mxu0 0.0
  %316 = vmatpush1.msra.mxu0 0.0
  %317 = vmatprep.subr.mxu0 0.0
  %318 = vmatpush1.msra.mxu0 0.0
  %319 = vmatprep.subr.mxu0 0.0
  %320 = vmatpush1.msra.mxu0 0.0
  %321 = vmatprep.subr.mxu0 0.0
  %322 = vmatpush1.msra.mxu0 0.0
  %323 = vmatprep.subr.mxu0 0.0
  %324 = vmatpush1.msra.mxu0 0.0
  %325 = vmatprep.subr.mxu0 0.0
  %326 = vmatpush1.msra.mxu0 0.0
  %327 = vmatprep.subr.mxu0 0.0
  %328 = vmatpush1.msra.mxu0 0.0
  %329 = vmatprep.mubr.f32.mxu0 0.0
  %330 = vmatmul.mubr.f32.gmra.mrb[0].mxu0 %v240
  %v331 = vpop.f32.mrb[0].mxu0
  %v332 = vadd.f32 0.0, %v331
  %v333 = vpop.f32.mrb[0].mxu0
  %334 = vmatprep.mubr.f32.mxu0 0.0
  %335 = vmatmul.mubr.f32.gmra.mrb[0].mxu0 %v245
  %v336 = vpop.f32.mrb[0].mxu0
  %v337 = vadd.f32 0.0, %v336
  %v338 = vpop.f32.mrb[0].mxu0
  %339 = vdwg.mxu0
  %340 = vmatprep.subr.mxu0 0.0
  %341 = vmatpush1.msra.mxu0 %v148
  %342 = vmatprep.subr.mxu0 0.0
  %343 = vmatpush1.msra.mxu0 %v149
  %344 = vmatprep.subr.mxu0 0.0
  %345 = vmatpush1.msra.mxu0 %v150
  %346 = vmatprep.subr.mxu0 0.0
  %347 = vmatpush1.msra.mxu0 %v151
  %348 = vmatprep.subr.mxu0 0.0
  %349 = vmatpush1.msra.mxu0 %v152
  %350 = vmatprep.subr.mxu0 0.0
  %351 = vmatpush1.msra.mxu0 %v153
  %352 = vmatprep.subr.mxu0 0.0
  %353 = vmatpush1.msra.mxu0 %v154
  %354 = vmatprep.subr.mxu0 0.0
  %355 = vmatpush1.msra.mxu0 %v155
  %356 = vmatprep.subr.mxu0 0.0
  %357 = vmatpush1.msra.mxu0 %v156
  %358 = vmatprep.subr.mxu0 0.0
  %359 = vmatpush1.msra.mxu0 %v157
  %360 = vmatprep.subr.mxu0 0.0
  %361 = vmatpush1.msra.mxu0 %v158
  %362 = vmatprep.subr.mxu0 0.0
  %363 = vmatpush1.msra.mxu0 %v159
  %364 = vmatprep.subr.mxu0 0.0
  %365 = vmatpush1.msra.mxu0 %v160
  %366 = vmatprep.subr.mxu0 0.0
  %367 = vmatpush1.msra.mxu0 %v161
  %368 = vmatprep.subr.mxu0 0.0
  %369 = vmatpush1.msra.mxu0 %v162
  %370 = vmatprep.subr.mxu0 0.0
  %371 = vmatpush1.msra.mxu0 %v163
  %372 = vmatprep.subr.mxu0 0.0
  %373 = vmatpush1.msra.mxu0 0.0
  %374 = vmatprep.subr.mxu0 0.0
  %375 = vmatpush1.msra.mxu0 0.0
  %376 = vmatprep.subr.mxu0 0.0
  %377 = vmatpush1.msra.mxu0 0.0
  %378 = vmatprep.subr.mxu0 0.0
  %379 = vmatpush1.msra.mxu0 0.0
  %380 = vmatprep.subr.mxu0 0.0
  %381 = vmatpush1.msra.mxu0 0.0
  %382 = vmatprep.subr.mxu0 0.0
  %383 = vmatpush1.msra.mxu0 0.0
  %384 = vmatprep.subr.mxu0 0.0
  %385 = vmatpush1.msra.mxu0 0.0
  %386 = vmatprep.subr.mxu0 0.0
  %387 = vmatpush1.msra.mxu0 0.0
  %388 = vmatprep.subr.mxu0 0.0
  %389 = vmatpush1.msra.mxu0 0.0
  %390 = vmatprep.subr.mxu0 0.0
  %391 = vmatpush1.msra.mxu0 0.0
  %392 = vmatprep.subr.mxu0 0.0
  %393 = vmatpush1.msra.mxu0 0.0
  %394 = vmatprep.subr.mxu0 0.0
  %395 = vmatpush1.msra.mxu0 0.0
  %396 = vmatprep.subr.mxu0 0.0
  %397 = vmatpush1.msra.mxu0 0.0
  %398 = vmatprep.subr.mxu0 0.0
  %399 = vmatpush1.msra.mxu0 0.0
  %400 = vmatprep.subr.mxu0 0.0
  %401 = vmatpush1.msra.mxu0 0.0
  %402 = vmatprep.subr.mxu0 0.0
  %403 = vmatpush1.msra.mxu0 0.0
  %404 = vmatprep.mubr.f32.mxu0 0.0
  %405 = vmatmul.mubr.f32.gmra.mrb[0].mxu0 %v140
  %v406 = vpop.f32.mrb[0].mxu0
  %v407 = vadd.f32 %v332, %v406
  %v408 = vpop.f32.mrb[0].mxu0
  %409 = vmatprep.mubr.f32.mxu0 0.0
  %410 = vmatmul.mubr.f32.gmra.mrb[0].mxu0 %v145
  %v411 = vpop.f32.mrb[0].mxu0
  %v412 = vadd.f32 %v337, %v411
  %v413 = vpop.f32.mrb[0].mxu0
  %414 = vdwg.mxu0
  %s415 = scalar_lea.vmem %s3, 32
  %v416 = vld [vmem:[%s415] sm:$0xff]
  %v417 = vld [vmem:[%s415 + $0x8] sm:$0xff]
  %v419 = vsel %vm66, %v416, 0
  %v422 = vsel %vm66, %v417, 0
  %424 = vmatprep.subr.mxu0 0.0
  %425 = vmatpush1.msra.mxu0 %v44
  %426 = vmatprep.subr.mxu0 0.0
  %427 = vmatpush1.msra.mxu0 %v45
  %428 = vmatprep.subr.mxu0 0.0
  %429 = vmatpush1.msra.mxu0 0.0
  %430 = vmatprep.subr.mxu0 0.0
  %431 = vmatpush1.msra.mxu0 0.0
  %432 = vmatprep.subr.mxu0 0.0
  %433 = vmatpush1.msra.mxu0 0.0
  %434 = vmatprep.subr.mxu0 0.0
  %435 = vmatpush1.msra.mxu0 0.0
  %436 = vmatprep.subr.mxu0 0.0
  %437 = vmatpush1.msra.mxu0 0.0
  %438 = vmatprep.subr.mxu0 0.0
  %439 = vmatpush1.msra.mxu0 0.0
  %440 = vmatprep.subr.mxu0 0.0
  %441 = vmatpush1.msra.mxu0 0.0
  %442 = vmatprep.subr.mxu0 0.0
  %443 = vmatpush1.msra.mxu0 0.0
  %444 = vmatprep.subr.mxu0 0.0
  %445 = vmatpush1.msra.mxu0 0.0
  %446 = vmatprep.subr.mxu0 0.0
  %447 = vmatpush1.msra.mxu0 0.0
  %448 = vmatprep.subr.mxu0 0.0
  %449 = vmatpush1.msra.mxu0 0.0
  %450 = vmatprep.subr.mxu0 0.0
  %451 = vmatpush1.msra.mxu0 0.0
  %452 = vmatprep.subr.mxu0 0.0
  %453 = vmatpush1.msra.mxu0 0.0
  %454 = vmatprep.subr.mxu0 0.0
  %455 = vmatpush1.msra.mxu0 0.0
  %456 = vmatprep.subr.mxu0 0.0
  %457 = vmatpush1.msra.mxu0 0.0
  %458 = vmatprep.subr.mxu0 0.0
  %459 = vmatpush1.msra.mxu0 0.0
  %460 = vmatprep.subr.mxu0 0.0
  %461 = vmatpush1.msra.mxu0 0.0
  %462 = vmatprep.subr.mxu0 0.0
  %463 = vmatpush1.msra.mxu0 0.0
  %464 = vmatprep.subr.mxu0 0.0
  %465 = vmatpush1.msra.mxu0 0.0
  %466 = vmatprep.subr.mxu0 0.0
  %467 = vmatpush1.msra.mxu0 0.0
  %468 = vmatprep.subr.mxu0 0.0
  %469 = vmatpush1.msra.mxu0 0.0
  %470 = vmatprep.subr.mxu0 0.0
  %471 = vmatpush1.msra.mxu0 0.0
  %472 = vmatprep.subr.mxu0 0.0
  %473 = vmatpush1.msra.mxu0 0.0
  %474 = vmatprep.subr.mxu0 0.0
  %475 = vmatpush1.msra.mxu0 0.0
  %476 = vmatprep.subr.mxu0 0.0
  %477 = vmatpush1.msra.mxu0 0.0
  %478 = vmatprep.subr.mxu0 0.0
  %479 = vmatpush1.msra.mxu0 0.0
  %480 = vmatprep.subr.mxu0 0.0
  %481 = vmatpush1.msra.mxu0 0.0
  %482 = vmatprep.subr.mxu0 0.0
  %483 = vmatpush1.msra.mxu0 0.0
  %484 = vmatprep.subr.mxu0 0.0
  %485 = vmatpush1.msra.mxu0 0.0
  %486 = vmatprep.subr.mxu0 0.0
  %487 = vmatpush1.msra.mxu0 0.0
  %488 = vmatprep.mubr.f32.mxu0 0.0
  %489 = vmatmul.mubr.f32.gmra.mrb[0].mxu0 %v419
  %v490 = vpop.f32.mrb[0].mxu0
  %v491 = vadd.f32 0.0, %v490
  %v492 = vpop.f32.mrb[0].mxu0
  %493 = vmatprep.mubr.f32.mxu0 0.0
  %494 = vmatmul.mubr.f32.gmra.mrb[0].mxu0 %v422
  %v495 = vpop.f32.mrb[0].mxu0
  %v496 = vadd.f32 0.0, %v495
  %v497 = vpop.f32.mrb[0].mxu0
  %498 = vdwg.mxu0
  %s499 = scalar_lea.vmem %s1, 256
  %v500 = vld [vmem:[%s499] sm:$0xff]
  %v501 = vld [vmem:[%s499 + $0x8] sm:$0xff]
  %v502 = vld [vmem:[%s499 + $0x10] sm:$0xff]
  %v503 = vld [vmem:[%s499 + $0x18] sm:$0xff]
  %v504 = vld [vmem:[%s499 + $0x20] sm:$0xff]
  %v505 = vld [vmem:[%s499 + $0x28] sm:$0xff]
  %v506 = vld [vmem:[%s499 + $0x30] sm:$0xff]
  %v507 = vld [vmem:[%s499 + $0x38] sm:$0xff]
  %v508 = vld [vmem:[%s499 + $0x40] sm:$0xff]
  %v509 = vld [vmem:[%s499 + $0x48] sm:$0xff]
  %v510 = vld [vmem:[%s499 + $0x50] sm:$0xff]
  %v511 = vld [vmem:[%s499 + $0x58] sm:$0xff]
  %v512 = vld [vmem:[%s499 + $0x60] sm:$0xff]
  %v513 = vld [vmem:[%s499 + $0x68] sm:$0xff]
  %v514 = vld [vmem:[%s499 + $0x70] sm:$0xff]
  %v515 = vld [vmem:[%s499 + $0x78] sm:$0xff]
  %516 = vmatprep.subr.mxu0 0.0
  %517 = vmatpush1.msra.mxu0 %v500
  %518 = vmatprep.subr.mxu0 0.0
  %519 = vmatpush1.msra.mxu0 %v501
  %520 = vmatprep.subr.mxu0 0.0
  %521 = vmatpush1.msra.mxu0 %v502
  %522 = vmatprep.subr.mxu0 0.0
  %523 = vmatpush1.msra.mxu0 %v503
  %524 = vmatprep.subr.mxu0 0.0
  %525 = vmatpush1.msra.mxu0 %v504
  %526 = vmatprep.subr.mxu0 0.0
  %527 = vmatpush1.msra.mxu0 %v505
  %528 = vmatprep.subr.mxu0 0.0
  %529 = vmatpush1.msra.mxu0 %v506
  %530 = vmatprep.subr.mxu0 0.0
  %531 = vmatpush1.msra.mxu0 %v507
  %532 = vmatprep.subr.mxu0 0.0
  %533 = vmatpush1.msra.mxu0 %v508
  %534 = vmatprep.subr.mxu0 0.0
  %535 = vmatpush1.msra.mxu0 %v509
  %536 = vmatprep.subr.mxu0 0.0
  %537 = vmatpush1.msra.mxu0 %v510
  %538 = vmatprep.subr.mxu0 0.0
  %539 = vmatpush1.msra.mxu0 %v511
  %540 = vmatprep.subr.mxu0 0.0
  %541 = vmatpush1.msra.mxu0 %v512
  %542 = vmatprep.subr.mxu0 0.0
  %543 = vmatpush1.msra.mxu0 %v513
  %544 = vmatprep.subr.mxu0 0.0
  %545 = vmatpush1.msra.mxu0 %v514
  %546 = vmatprep.subr.mxu0 0.0
  %547 = vmatpush1.msra.mxu0 %v515
  %548 = vmatprep.subr.mxu0 0.0
  %549 = vmatpush1.msra.mxu0 0.0
  %550 = vmatprep.subr.mxu0 0.0
  %551 = vmatpush1.msra.mxu0 0.0
  %552 = vmatprep.subr.mxu0 0.0
  %553 = vmatpush1.msra.mxu0 0.0
  %554 = vmatprep.subr.mxu0 0.0
  %555 = vmatpush1.msra.mxu0 0.0
  %556 = vmatprep.subr.mxu0 0.0
  %557 = vmatpush1.msra.mxu0 0.0
  %558 = vmatprep.subr.mxu0 0.0
  %559 = vmatpush1.msra.mxu0 0.0
  %560 = vmatprep.subr.mxu0 0.0
  %561 = vmatpush1.msra.mxu0 0.0
  %562 = vmatprep.subr.mxu0 0.0
  %563 = vmatpush1.msra.mxu0 0.0
  %564 = vmatprep.subr.mxu0 0.0
  %565 = vmatpush1.msra.mxu0 0.0
  %566 = vmatprep.subr.mxu0 0.0
  %567 = vmatpush1.msra.mxu0 0.0
  %568 = vmatprep.subr.mxu0 0.0
  %569 = vmatpush1.msra.mxu0 0.0
  %570 = vmatprep.subr.mxu0 0.0
  %571 = vmatpush1.msra.mxu0 0.0
  %572 = vmatprep.subr.mxu0 0.0
  %573 = vmatpush1.msra.mxu0 0.0
  %574 = vmatprep.subr.mxu0 0.0
  %575 = vmatpush1.msra.mxu0 0.0
  %576 = vmatprep.subr.mxu0 0.0
  %577 = vmatpush1.msra.mxu0 0.0
  %578 = vmatprep.subr.mxu0 0.0
  %579 = vmatpush1.msra.mxu0 0.0
  %580 = vmatprep.mubr.f32.mxu0 0.0
  %581 = vmatmul.mubr.f32.gmra.mrb[0].mxu0 %v491
  %v582 = vpop.f32.mrb[0].mxu0
  %v583 = vadd.f32 0.0, %v582
  %v584 = vpop.f32.mrb[0].mxu0
  %585 = vmatprep.mubr.f32.mxu0 0.0
  %586 = vmatmul.mubr.f32.gmra.mrb[0].mxu0 %v496
  %v587 = vpop.f32.mrb[0].mxu0
  %v588 = vadd.f32 0.0, %v587
  %v589 = vpop.f32.mrb[0].mxu0
  %590 = vdwg.mxu0
  %v591 = vadd.f32 %v407, %v583
  %v592 = vadd.f32 %v412, %v588
  %v593 = vadd.f32 %v591, %v592
  %v594 = vrot.slane %v593, 4
  %v595 = vadd.f32 %v593, %v594
  %v596 = vrot.slane %v595, 2
  %v597 = vadd.f32 %v595, %v596
  %v598 = vrot.slane %v597, 1
  %v599 = vadd.f32 %v597, %v598
  %600 = vmatprep.subr.mxu0 0.0
  %601 = vmatpush1.msra.mxu0 %v46
  %602 = vmatprep.subr.mxu0 0.0
  %603 = vmatpush1.msra.mxu0 %v47
  %604 = vmatprep.subr.mxu0 0.0
  %605 = vmatpush1.msra.mxu0 %v48
  %606 = vmatprep.subr.mxu0 0.0
  %607 = vmatpush1.msra.mxu0 %v49
  %608 = vmatprep.subr.mxu0 0.0
  %609 = vmatpush1.msra.mxu0 %v50
  %610 = vmatprep.subr.mxu0 0.0
  %611 = vmatpush1.msra.mxu0 %v51
  %612 = vmatprep.subr.mxu0 0.0
  %613 = vmatpush1.msra.mxu0 %v52
  %614 = vmatprep.subr.mxu0 0.0
  %615 = vmatpush1.msra.mxu0 %v53
  %616 = vmatprep.subr.mxu0 0.0
  %617 = vmatpush1.msra.mxu0 %v54
  %618 = vmatprep.subr.mxu0 0.0
  %619 = vmatpush1.msra.mxu0 %v55
  %620 = vmatprep.subr.mxu0 0.0
  %621 = vmatpush1.msra.mxu0 %v56
  %622 = vmatprep.subr.mxu0 0.0
  %623 = vmatpush1.msra.mxu0 %v57
  %624 = vmatprep.subr.mxu0 0.0
  %625 = vmatpush1.msra.mxu0 %v58
  %626 = vmatprep.subr.mxu0 0.0
  %627 = vmatpush1.msra.mxu0 %v59
  %628 = vmatprep.subr.mxu0 0.0
  %629 = vmatpush1.msra.mxu0 %v60
  %630 = vmatprep.subr.mxu0 0.0
  %631 = vmatpush1.msra.mxu0 %v61
  %632 = vmatprep.subr.mxu0 0.0
  %633 = vmatpush1.msra.mxu0 0.0
  %634 = vmatprep.subr.mxu0 0.0
  %635 = vmatpush1.msra.mxu0 0.0
  %636 = vmatprep.subr.mxu0 0.0
  %637 = vmatpush1.msra.mxu0 0.0
  %638 = vmatprep.subr.mxu0 0.0
  %639 = vmatpush1.msra.mxu0 0.0
  %640 = vmatprep.subr.mxu0 0.0
  %641 = vmatpush1.msra.mxu0 0.0
  %642 = vmatprep.subr.mxu0 0.0
  %643 = vmatpush1.msra.mxu0 0.0
  %644 = vmatprep.subr.mxu0 0.0
  %645 = vmatpush1.msra.mxu0 0.0
  %646 = vmatprep.subr.mxu0 0.0
  %647 = vmatpush1.msra.mxu0 0.0
  %648 = vmatprep.subr.mxu0 0.0
  %649 = vmatpush1.msra.mxu0 0.0
  %650 = vmatprep.subr.mxu0 0.0
  %651 = vmatpush1.msra.mxu0 0.0
  %652 = vmatprep.subr.mxu0 0.0
  %653 = vmatpush1.msra.mxu0 0.0
  %654 = vmatprep.subr.mxu0 0.0
  %655 = vmatpush1.msra.mxu0 0.0
  %656 = vmatprep.subr.mxu0 0.0
  %657 = vmatpush1.msra.mxu0 0.0
  %658 = vmatprep.subr.mxu0 0.0
  %659 = vmatpush1.msra.mxu0 0.0
  %660 = vmatprep.subr.mxu0 0.0
  %661 = vmatpush1.msra.mxu0 0.0
  %662 = vmatprep.subr.mxu0 0.0
  %663 = vmatpush1.msra.mxu0 0.0
  %664 = vmatprep.mubr.f32.mxu0 0.0
  %665 = vmatmul.mubr.f32.gmra.mrb[0].mxu0 %v599
  %v666 = vpop.f32.mrb[0].mxu0
  %v667 = vadd.f32 0.0, %v666
  %v668 = vpop.f32.mrb[0].mxu0
  %669 = vdwg.mxu0
  %v670 = vmul.f32 %v667, 0.0078125
  %v672 = vsel %vm66, %v670, 0
  %674 = vmatprep.subr.mxu0 0.0
  %675 = vmatpush1.msra.mxu0 %v62
  %676 = vmatprep.subr.mxu0 0.0
  %677 = vmatpush1.msra.mxu0 %v63
  %678 = vmatprep.subr.mxu0 0.0
  %679 = vmatpush1.msra.mxu0 0.0
  %680 = vmatprep.subr.mxu0 0.0
  %681 = vmatpush1.msra.mxu0 0.0
  %682 = vmatprep.subr.mxu0 0.0
  %683 = vmatpush1.msra.mxu0 0.0
  %684 = vmatprep.subr.mxu0 0.0
  %685 = vmatpush1.msra.mxu0 0.0
  %686 = vmatprep.subr.mxu0 0.0
  %687 = vmatpush1.msra.mxu0 0.0
  %688 = vmatprep.subr.mxu0 0.0
  %689 = vmatpush1.msra.mxu0 0.0
  %690 = vmatprep.subr.mxu0 0.0
  %691 = vmatpush1.msra.mxu0 0.0
  %692 = vmatprep.subr.mxu0 0.0
  %693 = vmatpush1.msra.mxu0 0.0
  %694 = vmatprep.subr.mxu0 0.0
  %695 = vmatpush1.msra.mxu0 0.0
  %696 = vmatprep.subr.mxu0 0.0
  %697 = vmatpush1.msra.mxu0 0.0
  %698 = vmatprep.subr.mxu0 0.0
  %699 = vmatpush1.msra.mxu0 0.0
  %700 = vmatprep.subr.mxu0 0.0
  %701 = vmatpush1.msra.mxu0 0.0
  %702 = vmatprep.subr.mxu0 0.0
  %703 = vmatpush1.msra.mxu0 0.0
  %704 = vmatprep.subr.mxu0 0.0
  %705 = vmatpush1.msra.mxu0 0.0
  %706 = vmatprep.subr.mxu0 0.0
  %707 = vmatpush1.msra.mxu0 0.0
  %708 = vmatprep.subr.mxu0 0.0
  %709 = vmatpush1.msra.mxu0 0.0
  %710 = vmatprep.subr.mxu0 0.0
  %711 = vmatpush1.msra.mxu0 0.0
  %712 = vmatprep.subr.mxu0 0.0
  %713 = vmatpush1.msra.mxu0 0.0
  %714 = vmatprep.subr.mxu0 0.0
  %715 = vmatpush1.msra.mxu0 0.0
  %716 = vmatprep.subr.mxu0 0.0
  %717 = vmatpush1.msra.mxu0 0.0
  %718 = vmatprep.subr.mxu0 0.0
  %719 = vmatpush1.msra.mxu0 0.0
  %720 = vmatprep.subr.mxu0 0.0
  %721 = vmatpush1.msra.mxu0 0.0
  %722 = vmatprep.subr.mxu0 0.0
  %723 = vmatpush1.msra.mxu0 0.0
  %724 = vmatprep.subr.mxu0 0.0
  %725 = vmatpush1.msra.mxu0 0.0
  %726 = vmatprep.subr.mxu0 0.0
  %727 = vmatpush1.msra.mxu0 0.0
  %728 = vmatprep.subr.mxu0 0.0
  %729 = vmatpush1.msra.mxu0 0.0
  %730 = vmatprep.subr.mxu0 0.0
  %731 = vmatpush1.msra.mxu0 0.0
  %732 = vmatprep.subr.mxu0 0.0
  %733 = vmatpush1.msra.mxu0 0.0
  %734 = vmatprep.subr.mxu0 0.0
  %735 = vmatpush1.msra.mxu0 0.0
  %736 = vmatprep.subr.mxu0 0.0
  %737 = vmatpush1.msra.mxu0 0.0
  %738 = vmatprep.mubr.f32.mxu0 0.0
  %739 = vmatmul.mubr.f32.gmra.mrb[0].mxu0 %v672
  %v740 = vpop.f32.mrb[0].mxu0
  %v741 = vadd.f32 0.0, %v740
  %v742 = vpop.f32.mrb[0].mxu0
  %743 = vdwg.mxu0
  %v744 = vlaneseq
  %v745 = vshrl.u32 %v744, 7
  %v746 = vsub.s32 0, %v745
  %v747 = vrot.slane %v741, %v746
  %v748 = vsub.f32 %v591, %v747
  %v749 = vsub.f32 %v592, %v747
  %v750 = vmul.f32 %v748, %v748
  %v751 = vmul.f32 %v749, %v749
  %v752 = vadd.f32 %v750, %v751
  %v753 = vrot.slane %v752, 4
  %v754 = vadd.f32 %v752, %v753
  %v755 = vrot.slane %v754, 2
  %v756 = vadd.f32 %v754, %v755
  %v757 = vrot.slane %v756, 1
  %v758 = vadd.f32 %v756, %v757
  %759 = vmatprep.subr.mxu0 0.0
  %760 = vmatpush1.msra.mxu0 %v46
  %761 = vmatprep.subr.mxu0 0.0
  %762 = vmatpush1.msra.mxu0 %v47
  %763 = vmatprep.subr.mxu0 0.0
  %764 = vmatpush1.msra.mxu0 %v48
  %765 = vmatprep.subr.mxu0 0.0
  %766 = vmatpush1.msra.mxu0 %v49
  %767 = vmatprep.subr.mxu0 0.0
  %768 = vmatpush1.msra.mxu0 %v50
  %769 = vmatprep.subr.mxu0 0.0
  %770 = vmatpush1.msra.mxu0 %v51
  %771 = vmatprep.subr.mxu0 0.0
  %772 = vmatpush1.msra.mxu0 %v52
  %773 = vmatprep.subr.mxu0 0.0
  %774 = vmatpush1.msra.mxu0 %v53
  %775 = vmatprep.subr.mxu0 0.0
  %776 = vmatpush1.msra.mxu0 %v54
  %777 = vmatprep.subr.mxu0 0.0
  %778 = vmatpush1.msra.mxu0 %v55
  %779 = vmatprep.subr.mxu0 0.0
  %780 = vmatpush1.msra.mxu0 %v56
  %781 = vmatprep.subr.mxu0 0.0
  %782 = vmatpush1.msra.mxu0 %v57
  %783 = vmatprep.subr.mxu0 0.0
  %784 = vmatpush1.msra.mxu0 %v58
  %785 = vmatprep.subr.mxu0 0.0
  %786 = vmatpush1.msra.mxu0 %v59
  %787 = vmatprep.subr.mxu0 0.0
  %788 = vmatpush1.msra.mxu0 %v60
  %789 = vmatprep.subr.mxu0 0.0
  %790 = vmatpush1.msra.mxu0 %v61
  %791 = vmatprep.subr.mxu0 0.0
  %792 = vmatpush1.msra.mxu0 0.0
  %793 = vmatprep.subr.mxu0 0.0
  %794 = vmatpush1.msra.mxu0 0.0
  %795 = vmatprep.subr.mxu0 0.0
  %796 = vmatpush1.msra.mxu0 0.0
  %797 = vmatprep.subr.mxu0 0.0
  %798 = vmatpush1.msra.mxu0 0.0
  %799 = vmatprep.subr.mxu0 0.0
  %800 = vmatpush1.msra.mxu0 0.0
  %801 = vmatprep.subr.mxu0 0.0
  %802 = vmatpush1.msra.mxu0 0.0
  %803 = vmatprep.subr.mxu0 0.0
  %804 = vmatpush1.msra.mxu0 0.0
  %805 = vmatprep.subr.mxu0 0.0
  %806 = vmatpush1.msra.mxu0 0.0
  %807 = vmatprep.subr.mxu0 0.0
  %808 = vmatpush1.msra.mxu0 0.0
  %809 = vmatprep.subr.mxu0 0.0
  %810 = vmatpush1.msra.mxu0 0.0
  %811 = vmatprep.subr.mxu0 0.0
  %812 = vmatpush1.msra.mxu0 0.0
  %813 = vmatprep.subr.mxu0 0.0
  %814 = vmatpush1.msra.mxu0 0.0
  %815 = vmatprep.subr.mxu0 0.0
  %816 = vmatpush1.msra.mxu0 0.0
  %817 = vmatprep.subr.mxu0 0.0
  %818 = vmatpush1.msra.mxu0 0.0
  %819 = vmatprep.subr.mxu0 0.0
  %820 = vmatpush1.msra.mxu0 0.0
  %821 = vmatprep.subr.mxu0 0.0
  %822 = vmatpush1.msra.mxu0 0.0
  %823 = vmatprep.mubr.f32.mxu0 0.0
  %824 = vmatmul.mubr.f32.gmra.mrb[0].mxu0 %v758
  %v825 = vpop.f32.mrb[0].mxu0
  %v826 = vadd.f32 0.0, %v825
  %v827 = vpop.f32.mrb[0].mxu0
  %828 = vdwg.mxu0
  %v829 = vmul.f32 %v826, 0.0078125
  %v830 = vadd.f32 %v829, 1e-05
  %v831 = vrsqrt.pop %v830
  %v833 = vsel %vm66, %v831, 0
  %835 = vmatprep.subr.mxu0 0.0
  %836 = vmatpush1.msra.mxu0 %v62
  %837 = vmatprep.subr.mxu0 0.0
  %838 = vmatpush1.msra.mxu0 %v63
  %839 = vmatprep.subr.mxu0 0.0
  %840 = vmatpush1.msra.mxu0 0.0
  %841 = vmatprep.subr.mxu0 0.0
  %842 = vmatpush1.msra.mxu0 0.0
  %843 = vmatprep.subr.mxu0 0.0
  %844 = vmatpush1.msra.mxu0 0.0
  %845 = vmatprep.subr.mxu0 0.0
  %846 = vmatpush1.msra.mxu0 0.0
  %847 = vmatprep.subr.mxu0 0.0
  %848 = vmatpush1.msra.mxu0 0.0
  %849 = vmatprep.subr.mxu0 0.0
  %850 = vmatpush1.msra.mxu0 0.0
  %851 = vmatprep.subr.mxu0 0.0
  %852 = vmatpush1.msra.mxu0 0.0
  %853 = vmatprep.subr.mxu0 0.0
  %854 = vmatpush1.msra.mxu0 0.0
  %855 = vmatprep.subr.mxu0 0.0
  %856 = vmatpush1.msra.mxu0 0.0
  %857 = vmatprep.subr.mxu0 0.0
  %858 = vmatpush1.msra.mxu0 0.0
  %859 = vmatprep.subr.mxu0 0.0
  %860 = vmatpush1.msra.mxu0 0.0
  %861 = vmatprep.subr.mxu0 0.0
  %862 = vmatpush1.msra.mxu0 0.0
  %863 = vmatprep.subr.mxu0 0.0
  %864 = vmatpush1.msra.mxu0 0.0
  %865 = vmatprep.subr.mxu0 0.0
  %866 = vmatpush1.msra.mxu0 0.0
  %867 = vmatprep.subr.mxu0 0.0
  %868 = vmatpush1.msra.mxu0 0.0
  %869 = vmatprep.subr.mxu0 0.0
  %870 = vmatpush1.msra.mxu0 0.0
  %871 = vmatprep.subr.mxu0 0.0
  %872 = vmatpush1.msra.mxu0 0.0
  %873 = vmatprep.subr.mxu0 0.0
  %874 = vmatpush1.msra.mxu0 0.0
  %875 = vmatprep.subr.mxu0 0.0
  %876 = vmatpush1.msra.mxu0 0.0
  %877 = vmatprep.subr.mxu0 0.0
  %878 = vmatpush1.msra.mxu0 0.0
  %879 = vmatprep.subr.mxu0 0.0
  %880 = vmatpush1.msra.mxu0 0.0
  %881 = vmatprep.subr.mxu0 0.0
  %882 = vmatpush1.msra.mxu0 0.0
  %883 = vmatprep.subr.mxu0 0.0
  %884 = vmatpush1.msra.mxu0 0.0
  %885 = vmatprep.subr.mxu0 0.0
  %886 = vmatpush1.msra.mxu0 0.0
  %887 = vmatprep.subr.mxu0 0.0
  %888 = vmatpush1.msra.mxu0 0.0
  %889 = vmatprep.subr.mxu0 0.0
  %890 = vmatpush1.msra.mxu0 0.0
  %891 = vmatprep.subr.mxu0 0.0
  %892 = vmatpush1.msra.mxu0 0.0
  %893 = vmatprep.subr.mxu0 0.0
  %894 = vmatpush1.msra.mxu0 0.0
  %895 = vmatprep.subr.mxu0 0.0
  %896 = vmatpush1.msra.mxu0 0.0
  %897 = vmatprep.subr.mxu0 0.0
  %898 = vmatpush1.msra.mxu0 0.0
  %899 = vmatprep.mubr.f32.mxu0 0.0
  %900 = vmatmul.mubr.f32.gmra.mrb[0].mxu0 %v833
  %v901 = vpop.f32.mrb[0].mxu0
  %v902 = vadd.f32 0.0, %v901
  %v903 = vpop.f32.mrb[0].mxu0
  %904 = vdwg.mxu0
  %v905 = vlaneseq
  %v906 = vshrl.u32 %v905, 7
  %v907 = vsub.s32 0, %v906
  %v908 = vrot.slane %v902, %v907
  %v909 = vmul.f32 %v748, %v908
  %v910 = vmul.f32 %v749, %v908
  %v911 = vld [vmem:[%s4] sm:$0x1]
  %v912 = vlaneseq
  %v913 = vshrl.u32 %v912, 7
  %v914 = vsub.s32 0, %v913
  %v915 = vrot.slane %v911, %v914
  %v916 = vmul.f32 %v909, %v915
  %v917 = vmul.f32 %v910, %v915
  %v918 = vld [vmem:[%s5] sm:$0x1]
  %v919 = vlaneseq
  %v920 = vshrl.u32 %v919, 7
  %v921 = vsub.s32 0, %v920
  %v922 = vrot.slane %v918, %v921
  %v923 = vadd.f32 %v916, %v922
  %v924 = vadd.f32 %v917, %v922
  %v925 = vmax.f32 %v923, 0.0
  %v926 = vmax.f32 %v924, 0.0
  %927 = vmatprep.subr.mxu0 0.0
  %928 = vmatpush1.msra.mxu0 %v925
  %929 = vmatprep.subr.mxu0 0.0
  %930 = vmatpush1.msra.mxu0 %v926
  %931 = vmatprep.subr.mxu0 0.0
  %932 = vmatpush1.msra.mxu0 0.0
  %933 = vmatprep.subr.mxu0 0.0
  %934 = vmatpush1.msra.mxu0 0.0
  %935 = vmatprep.subr.mxu0 0.0
  %936 = vmatpush1.msra.mxu0 0.0
  %937 = vmatprep.subr.mxu0 0.0
  %938 = vmatpush1.msra.mxu0 0.0
  %939 = vmatprep.subr.mxu0 0.0
  %940 = vmatpush1.msra.mxu0 0.0
  %941 = vmatprep.subr.mxu0 0.0
  %942 = vmatpush1.msra.mxu0 0.0
  %943 = vmatprep.subr.mxu0 0.0
  %944 = vmatpush1.msra.mxu0 0.0
  %945 = vmatprep.subr.mxu0 0.0
  %946 = vmatpush1.msra.mxu0 0.0
  %947 = vmatprep.subr.mxu0 0.0
  %948 = vmatpush1.msra.mxu0 0.0
  %949 = vmatprep.subr.mxu0 0.0
  %950 = vmatpush1.msra.mxu0 0.0
  %951 = vmatprep.subr.mxu0 0.0
  %952 = vmatpush1.msra.mxu0 0.0
  %953 = vmatprep.subr.mxu0 0.0
  %954 = vmatpush1.msra.mxu0 0.0
  %955 = vmatprep.subr.mxu0 0.0
  %956 = vmatpush1.msra.mxu0 0.0
  %957 = vmatprep.subr.mxu0 0.0
  %958 = vmatpush1.msra.mxu0 0.0
  %959 = vmatprep.subr.mxu0 0.0
  %960 = vmatpush1.msra.mxu0 0.0
  %961 = vmatprep.subr.mxu0 0.0
  %962 = vmatpush1.msra.mxu0 0.0
  %963 = vmatprep.subr.mxu0 0.0
  %964 = vmatpush1.msra.mxu0 0.0
  %965 = vmatprep.subr.mxu0 0.0
  %966 = vmatpush1.msra.mxu0 0.0
  %967 = vmatprep.subr.mxu0 0.0
  %968 = vmatpush1.msra.mxu0 0.0
  %969 = vmatprep.subr.mxu0 0.0
  %970 = vmatpush1.msra.mxu0 0.0
  %971 = vmatprep.subr.mxu0 0.0
  %972 = vmatpush1.msra.mxu0 0.0
  %973 = vmatprep.subr.mxu0 0.0
  %974 = vmatpush1.msra.mxu0 0.0
  %975 = vmatprep.subr.mxu0 0.0
  %976 = vmatpush1.msra.mxu0 0.0
  %977 = vmatprep.subr.mxu0 0.0
  %978 = vmatpush1.msra.mxu0 0.0
  %979 = vmatprep.subr.mxu0 0.0
  %980 = vmatpush1.msra.mxu0 0.0
  %981 = vmatprep.subr.mxu0 0.0
  %982 = vmatpush1.msra.mxu0 0.0
  %983 = vmatprep.subr.mxu0 0.0
  %984 = vmatpush1.msra.mxu0 0.0
  %985 = vmatprep.subr.mxu0 0.0
  %986 = vmatpush1.msra.mxu0 0.0
  %987 = vmatprep.subr.mxu0 0.0
  %988 = vmatpush1.msra.mxu0 0.0
  %989 = vmatprep.subr.mxu0 0.0
  %990 = vmatpush1.msra.mxu0 0.0
  %991 = vmatprep.mubr.f32.mxu0 0.0
  %992 = vmatmul.mubr.f32.gmra.mrb[0].mxu0 %v68
  %v993 = vpop.f32.mrb[0].mxu0
  %v994 = vadd.f32 0.0, %v993
  %v995 = vpop.f32.mrb[0].mxu0
  %996 = vmatprep.mubr.f32.mxu0 0.0
  %997 = vmatmul.mubr.f32.gmra.mrb[0].mxu0 %v71
  %v998 = vpop.f32.mrb[0].mxu0
  %v999 = vadd.f32 0.0, %v998
  %v1000 = vpop.f32.mrb[0].mxu0
  %1001 = vdwg.mxu0
  %v1002 = vld [vmem:[%s2] sm:$0xff]
  %v1003 = vld [vmem:[%s2 + $0x8] sm:$0xff]
  %v1004 = vld [vmem:[%s2 + $0x10] sm:$0xff]
  %v1005 = vld [vmem:[%s2 + $0x18] sm:$0xff]
  %v1006 = vld [vmem:[%s2 + $0x20] sm:$0xff]
  %v1007 = vld [vmem:[%s2 + $0x28] sm:$0xff]
  %v1008 = vld [vmem:[%s2 + $0x30] sm:$0xff]
  %v1009 = vld [vmem:[%s2 + $0x38] sm:$0xff]
  %v1010 = vld [vmem:[%s2 + $0x40] sm:$0xff]
  %v1011 = vld [vmem:[%s2 + $0x48] sm:$0xff]
  %v1012 = vld [vmem:[%s2 + $0x50] sm:$0xff]
  %v1013 = vld [vmem:[%s2 + $0x58] sm:$0xff]
  %v1014 = vld [vmem:[%s2 + $0x60] sm:$0xff]
  %v1015 = vld [vmem:[%s2 + $0x68] sm:$0xff]
  %v1016 = vld [vmem:[%s2 + $0x70] sm:$0xff]
  %v1017 = vld [vmem:[%s2 + $0x78] sm:$0xff]
  %1018 = vmatprep.subr.mxu0 0.0
  %1019 = vmatpush1.msra.mxu0 %v925
  %1020 = vmatprep.subr.mxu0 0.0
  %1021 = vmatpush1.msra.mxu0 %v926
  %1022 = vmatprep.subr.mxu0 0.0
  %1023 = vmatpush1.msra.mxu0 0.0
  %1024 = vmatprep.subr.mxu0 0.0
  %1025 = vmatpush1.msra.mxu0 0.0
  %1026 = vmatprep.subr.mxu0 0.0
  %1027 = vmatpush1.msra.mxu0 0.0
  %1028 = vmatprep.subr.mxu0 0.0
  %1029 = vmatpush1.msra.mxu0 0.0
  %1030 = vmatprep.subr.mxu0 0.0
  %1031 = vmatpush1.msra.mxu0 0.0
  %1032 = vmatprep.subr.mxu0 0.0
  %1033 = vmatpush1.msra.mxu0 0.0
  %1034 = vmatprep.subr.mxu0 0.0
  %1035 = vmatpush1.msra.mxu0 0.0
  %1036 = vmatprep.subr.mxu0 0.0
  %1037 = vmatpush1.msra.mxu0 0.0
  %1038 = vmatprep.subr.mxu0 0.0
  %1039 = vmatpush1.msra.mxu0 0.0
  %1040 = vmatprep.subr.mxu0 0.0
  %1041 = vmatpush1.msra.mxu0 0.0
  %1042 = vmatprep.subr.mxu0 0.0
  %1043 = vmatpush1.msra.mxu0 0.0
  %1044 = vmatprep.subr.mxu0 0.0
  %1045 = vmatpush1.msra.mxu0 0.0
  %1046 = vmatprep.subr.mxu0 0.0
  %1047 = vmatpush1.msra.mxu0 0.0
  %1048 = vmatprep.subr.mxu0 0.0
  %1049 = vmatpush1.msra.mxu0 0.0
  %1050 = vmatprep.subr.mxu0 0.0
  %1051 = vmatpush1.msra.mxu0 0.0
  %1052 = vmatprep.subr.mxu0 0.0
  %1053 = vmatpush1.msra.mxu0 0.0
  %1054 = vmatprep.subr.mxu0 0.0
  %1055 = vmatpush1.msra.mxu0 0.0
  %1056 = vmatprep.subr.mxu0 0.0
  %1057 = vmatpush1.msra.mxu0 0.0
  %1058 = vmatprep.subr.mxu0 0.0
  %1059 = vmatpush1.msra.mxu0 0.0
  %1060 = vmatprep.subr.mxu0 0.0
  %1061 = vmatpush1.msra.mxu0 0.0
  %1062 = vmatprep.subr.mxu0 0.0
  %1063 = vmatpush1.msra.mxu0 0.0
  %1064 = vmatprep.subr.mxu0 0.0
  %1065 = vmatpush1.msra.mxu0 0.0
  %1066 = vmatprep.subr.mxu0 0.0
  %1067 = vmatpush1.msra.mxu0 0.0
  %1068 = vmatprep.subr.mxu0 0.0
  %1069 = vmatpush1.msra.mxu0 0.0
  %1070 = vmatprep.subr.mxu0 0.0
  %1071 = vmatpush1.msra.mxu0 0.0
  %1072 = vmatprep.subr.mxu0 0.0
  %1073 = vmatpush1.msra.mxu0 0.0
  %1074 = vmatprep.subr.mxu0 0.0
  %1075 = vmatpush1.msra.mxu0 0.0
  %1076 = vmatprep.subr.mxu0 0.0
  %1077 = vmatpush1.msra.mxu0 0.0
  %1078 = vmatprep.subr.mxu0 0.0
  %1079 = vmatpush1.msra.mxu0 0.0
  %1080 = vmatprep.subr.mxu0 0.0
  %1081 = vmatpush1.msra.mxu0 0.0
  %1082 = vmatprep.mubr.f32.mxu0 0.0
  %1083 = vmatmul.mubr.f32.gmra.mrb[0].mxu0 %v168
  %v1084 = vpop.f32.mrb[0].mxu0
  %v1085 = vadd.f32 0.0, %v1084
  %v1086 = vpop.f32.mrb[0].mxu0
  %1087 = vmatprep.mubr.f32.mxu0 0.0
  %1088 = vmatmul.mubr.f32.gmra.mrb[0].mxu0 %v171
  %v1089 = vpop.f32.mrb[0].mxu0
  %v1090 = vadd.f32 0.0, %v1089
  %v1091 = vpop.f32.mrb[0].mxu0
  %1092 = vdwg.mxu0
  %s1093 = scalar_lea.vmem %s2, 128
  %v1094 = vld [vmem:[%s1093] sm:$0xff]
  %v1095 = vld [vmem:[%s1093 + $0x8] sm:$0xff]
  %v1096 = vld [vmem:[%s1093 + $0x10] sm:$0xff]
  %v1097 = vld [vmem:[%s1093 + $0x18] sm:$0xff]
  %v1098 = vld [vmem:[%s1093 + $0x20] sm:$0xff]
  %v1099 = vld [vmem:[%s1093 + $0x28] sm:$0xff]
  %v1100 = vld [vmem:[%s1093 + $0x30] sm:$0xff]
  %v1101 = vld [vmem:[%s1093 + $0x38] sm:$0xff]
  %v1102 = vld [vmem:[%s1093 + $0x40] sm:$0xff]
  %v1103 = vld [vmem:[%s1093 + $0x48] sm:$0xff]
  %v1104 = vld [vmem:[%s1093 + $0x50] sm:$0xff]
  %v1105 = vld [vmem:[%s1093 + $0x58] sm:$0xff]
  %v1106 = vld [vmem:[%s1093 + $0x60] sm:$0xff]
  %v1107 = vld [vmem:[%s1093 + $0x68] sm:$0xff]
  %v1108 = vld [vmem:[%s1093 + $0x70] sm:$0xff]
  %v1109 = vld [vmem:[%s1093 + $0x78] sm:$0xff]
  %1110 = vmatprep.subr.mxu0 0.0
  %1111 = vmatpush1.msra.mxu0 %v1094
  %1112 = vmatprep.subr.mxu0 0.0
  %1113 = vmatpush1.msra.mxu0 %v1095
  %1114 = vmatprep.subr.mxu0 0.0
  %1115 = vmatpush1.msra.mxu0 %v1096
  %1116 = vmatprep.subr.mxu0 0.0
  %1117 = vmatpush1.msra.mxu0 %v1097
  %1118 = vmatprep.subr.mxu0 0.0
  %1119 = vmatpush1.msra.mxu0 %v1098
  %1120 = vmatprep.subr.mxu0 0.0
  %1121 = vmatpush1.msra.mxu0 %v1099
  %1122 = vmatprep.subr.mxu0 0.0
  %1123 = vmatpush1.msra.mxu0 %v1100
  %1124 = vmatprep.subr.mxu0 0.0
  %1125 = vmatpush1.msra.mxu0 %v1101
  %1126 = vmatprep.subr.mxu0 0.0
  %1127 = vmatpush1.msra.mxu0 %v1102
  %1128 = vmatprep.subr.mxu0 0.0
  %1129 = vmatpush1.msra.mxu0 %v1103
  %1130 = vmatprep.subr.mxu0 0.0
  %1131 = vmatpush1.msra.mxu0 %v1104
  %1132 = vmatprep.subr.mxu0 0.0
  %1133 = vmatpush1.msra.mxu0 %v1105
  %1134 = vmatprep.subr.mxu0 0.0
  %1135 = vmatpush1.msra.mxu0 %v1106
  %1136 = vmatprep.subr.mxu0 0.0
  %1137 = vmatpush1.msra.mxu0 %v1107
  %1138 = vmatprep.subr.mxu0 0.0
  %1139 = vmatpush1.msra.mxu0 %v1108
  %1140 = vmatprep.subr.mxu0 0.0
  %1141 = vmatpush1.msra.mxu0 %v1109
  %1142 = vmatprep.subr.mxu0 0.0
  %1143 = vmatpush1.msra.mxu0 0.0
  %1144 = vmatprep.subr.mxu0 0.0
  %1145 = vmatpush1.msra.mxu0 0.0
  %1146 = vmatprep.subr.mxu0 0.0
  %1147 = vmatpush1.msra.mxu0 0.0
  %1148 = vmatprep.subr.mxu0 0.0
  %1149 = vmatpush1.msra.mxu0 0.0
  %1150 = vmatprep.subr.mxu0 0.0
  %1151 = vmatpush1.msra.mxu0 0.0
  %1152 = vmatprep.subr.mxu0 0.0
  %1153 = vmatpush1.msra.mxu0 0.0
  %1154 = vmatprep.subr.mxu0 0.0
  %1155 = vmatpush1.msra.mxu0 0.0
  %1156 = vmatprep.subr.mxu0 0.0
  %1157 = vmatpush1.msra.mxu0 0.0
  %1158 = vmatprep.subr.mxu0 0.0
  %1159 = vmatpush1.msra.mxu0 0.0
  %1160 = vmatprep.subr.mxu0 0.0
  %1161 = vmatpush1.msra.mxu0 0.0
  %1162 = vmatprep.subr.mxu0 0.0
  %1163 = vmatpush1.msra.mxu0 0.0
  %1164 = vmatprep.subr.mxu0 0.0
  %1165 = vmatpush1.msra.mxu0 0.0
  %1166 = vmatprep.subr.mxu0 0.0
  %1167 = vmatpush1.msra.mxu0 0.0
  %1168 = vmatprep.subr.mxu0 0.0
  %1169 = vmatpush1.msra.mxu0 0.0
  %1170 = vmatprep.subr.mxu0 0.0
  %1171 = vmatpush1.msra.mxu0 0.0
  %1172 = vmatprep.subr.mxu0 0.0
  %1173 = vmatpush1.msra.mxu0 0.0
  %1174 = vmatprep.mubr.f32.mxu0 0.0
  %1175 = vmatmul.mubr.f32.gmra.mrb[0].mxu0 %v1085
  %v1176 = vpop.f32.mrb[0].mxu0
  %v1177 = vadd.f32 0.0, %v1176
  %v1178 = vpop.f32.mrb[0].mxu0
  %1179 = vmatprep.mubr.f32.mxu0 0.0
  %1180 = vmatmul.mubr.f32.gmra.mrb[0].mxu0 %v1090
  %v1181 = vpop.f32.mrb[0].mxu0
  %v1182 = vadd.f32 0.0, %v1181
  %v1183 = vpop.f32.mrb[0].mxu0
  %1184 = vdwg.mxu0
  %1185 = vmatprep.subr.mxu0 0.0
  %1186 = vmatpush1.msra.mxu0 %v1002
  %1187 = vmatprep.subr.mxu0 0.0
  %1188 = vmatpush1.msra.mxu0 %v1003
  %1189 = vmatprep.subr.mxu0 0.0
  %1190 = vmatpush1.msra.mxu0 %v1004
  %1191 = vmatprep.subr.mxu0 0.0
  %1192 = vmatpush1.msra.mxu0 %v1005
  %1193 = vmatprep.subr.mxu0 0.0
  %1194 = vmatpush1.msra.mxu0 %v1006
  %1195 = vmatprep.subr.mxu0 0.0
  %1196 = vmatpush1.msra.mxu0 %v1007
  %1197 = vmatprep.subr.mxu0 0.0
  %1198 = vmatpush1.msra.mxu0 %v1008
  %1199 = vmatprep.subr.mxu0 0.0
  %1200 = vmatpush1.msra.mxu0 %v1009
  %1201 = vmatprep.subr.mxu0 0.0
  %1202 = vmatpush1.msra.mxu0 %v1010
  %1203 = vmatprep.subr.mxu0 0.0
  %1204 = vmatpush1.msra.mxu0 %v1011
  %1205 = vmatprep.subr.mxu0 0.0
  %1206 = vmatpush1.msra.mxu0 %v1012
  %1207 = vmatprep.subr.mxu0 0.0
  %1208 = vmatpush1.msra.mxu0 %v1013
  %1209 = vmatprep.subr.mxu0 0.0
  %1210 = vmatpush1.msra.mxu0 %v1014
  %1211 = vmatprep.subr.mxu0 0.0
  %1212 = vmatpush1.msra.mxu0 %v1015
  %1213 = vmatprep.subr.mxu0 0.0
  %1214 = vmatpush1.msra.mxu0 %v1016
  %1215 = vmatprep.subr.mxu0 0.0
  %1216 = vmatpush1.msra.mxu0 %v1017
  %1217 = vmatprep.subr.mxu0 0.0
  %1218 = vmatpush1.msra.mxu0 0.0
  %1219 = vmatprep.subr.mxu0 0.0
  %1220 = vmatpush1.msra.mxu0 0.0
  %1221 = vmatprep.subr.mxu0 0.0
  %1222 = vmatpush1.msra.mxu0 0.0
  %1223 = vmatprep.subr.mxu0 0.0
  %1224 = vmatpush1.msra.mxu0 0.0
  %1225 = vmatprep.subr.mxu0 0.0
  %1226 = vmatpush1.msra.mxu0 0.0
  %1227 = vmatprep.subr.mxu0 0.0
  %1228 = vmatpush1.msra.mxu0 0.0
  %1229 = vmatprep.subr.mxu0 0.0
  %1230 = vmatpush1.msra.mxu0 0.0
  %1231 = vmatprep.subr.mxu0 0.0
  %1232 = vmatpush1.msra.mxu0 0.0
  %1233 = vmatprep.subr.mxu0 0.0
  %1234 = vmatpush1.msra.mxu0 0.0
  %1235 = vmatprep.subr.mxu0 0.0
  %1236 = vmatpush1.msra.mxu0 0.0
  %1237 = vmatprep.subr.mxu0 0.0
  %1238 = vmatpush1.msra.mxu0 0.0
  %1239 = vmatprep.subr.mxu0 0.0
  %1240 = vmatpush1.msra.mxu0 0.0
  %1241 = vmatprep.subr.mxu0 0.0
  %1242 = vmatpush1.msra.mxu0 0.0
  %1243 = vmatprep.subr.mxu0 0.0
  %1244 = vmatpush1.msra.mxu0 0.0
  %1245 = vmatprep.subr.mxu0 0.0
  %1246 = vmatpush1.msra.mxu0 0.0
  %1247 = vmatprep.subr.mxu0 0.0
  %1248 = vmatpush1.msra.mxu0 0.0
  %1249 = vmatprep.mubr.f32.mxu0 0.0
  %1250 = vmatmul.mubr.f32.gmra.mrb[0].mxu0 %v994
  %v1251 = vpop.f32.mrb[0].mxu0
  %v1252 = vadd.f32 %v1177, %v1251
  %v1253 = vpop.f32.mrb[0].mxu0
  %1254 = vmatprep.mubr.f32.mxu0 0.0
  %1255 = vmatmul.mubr.f32.gmra.mrb[0].mxu0 %v999
  %v1256 = vpop.f32.mrb[0].mxu0
  %v1257 = vadd.f32 %v1182, %v1256
  %v1258 = vpop.f32.mrb[0].mxu0
  %1259 = vdwg.mxu0
  %1260 = vmatprep.subr.mxu0 0.0
  %1261 = vmatpush1.msra.mxu0 %v925
  %1262 = vmatprep.subr.mxu0 0.0
  %1263 = vmatpush1.msra.mxu0 %v926
  %1264 = vmatprep.subr.mxu0 0.0
  %1265 = vmatpush1.msra.mxu0 0.0
  %1266 = vmatprep.subr.mxu0 0.0
  %1267 = vmatpush1.msra.mxu0 0.0
  %1268 = vmatprep.subr.mxu0 0.0
  %1269 = vmatpush1.msra.mxu0 0.0
  %1270 = vmatprep.subr.mxu0 0.0
  %1271 = vmatpush1.msra.mxu0 0.0
  %1272 = vmatprep.subr.mxu0 0.0
  %1273 = vmatpush1.msra.mxu0 0.0
  %1274 = vmatprep.subr.mxu0 0.0
  %1275 = vmatpush1.msra.mxu0 0.0
  %1276 = vmatprep.subr.mxu0 0.0
  %1277 = vmatpush1.msra.mxu0 0.0
  %1278 = vmatprep.subr.mxu0 0.0
  %1279 = vmatpush1.msra.mxu0 0.0
  %1280 = vmatprep.subr.mxu0 0.0
  %1281 = vmatpush1.msra.mxu0 0.0
  %1282 = vmatprep.subr.mxu0 0.0
  %1283 = vmatpush1.msra.mxu0 0.0
  %1284 = vmatprep.subr.mxu0 0.0
  %1285 = vmatpush1.msra.mxu0 0.0
  %1286 = vmatprep.subr.mxu0 0.0
  %1287 = vmatpush1.msra.mxu0 0.0
  %1288 = vmatprep.subr.mxu0 0.0
  %1289 = vmatpush1.msra.mxu0 0.0
  %1290 = vmatprep.subr.mxu0 0.0
  %1291 = vmatpush1.msra.mxu0 0.0
  %1292 = vmatprep.subr.mxu0 0.0
  %1293 = vmatpush1.msra.mxu0 0.0
  %1294 = vmatprep.subr.mxu0 0.0
  %1295 = vmatpush1.msra.mxu0 0.0
  %1296 = vmatprep.subr.mxu0 0.0
  %1297 = vmatpush1.msra.mxu0 0.0
  %1298 = vmatprep.subr.mxu0 0.0
  %1299 = vmatpush1.msra.mxu0 0.0
  %1300 = vmatprep.subr.mxu0 0.0
  %1301 = vmatpush1.msra.mxu0 0.0
  %1302 = vmatprep.subr.mxu0 0.0
  %1303 = vmatpush1.msra.mxu0 0.0
  %1304 = vmatprep.subr.mxu0 0.0
  %1305 = vmatpush1.msra.mxu0 0.0
  %1306 = vmatprep.subr.mxu0 0.0
  %1307 = vmatpush1.msra.mxu0 0.0
  %1308 = vmatprep.subr.mxu0 0.0
  %1309 = vmatpush1.msra.mxu0 0.0
  %1310 = vmatprep.subr.mxu0 0.0
  %1311 = vmatpush1.msra.mxu0 0.0
  %1312 = vmatprep.subr.mxu0 0.0
  %1313 = vmatpush1.msra.mxu0 0.0
  %1314 = vmatprep.subr.mxu0 0.0
  %1315 = vmatpush1.msra.mxu0 0.0
  %1316 = vmatprep.subr.mxu0 0.0
  %1317 = vmatpush1.msra.mxu0 0.0
  %1318 = vmatprep.subr.mxu0 0.0
  %1319 = vmatpush1.msra.mxu0 0.0
  %1320 = vmatprep.subr.mxu0 0.0
  %1321 = vmatpush1.msra.mxu0 0.0
  %1322 = vmatprep.subr.mxu0 0.0
  %1323 = vmatpush1.msra.mxu0 0.0
  %1324 = vmatprep.mubr.f32.mxu0 0.0
  %1325 = vmatmul.mubr.f32.gmra.mrb[0].mxu0 %v419
  %v1326 = vpop.f32.mrb[0].mxu0
  %v1327 = vadd.f32 0.0, %v1326
  %v1328 = vpop.f32.mrb[0].mxu0
  %1329 = vmatprep.mubr.f32.mxu0 0.0
  %1330 = vmatmul.mubr.f32.gmra.mrb[0].mxu0 %v422
  %v1331 = vpop.f32.mrb[0].mxu0
  %v1332 = vadd.f32 0.0, %v1331
  %v1333 = vpop.f32.mrb[0].mxu0
  %1334 = vdwg.mxu0
  %s1335 = scalar_lea.vmem %s2, 256
  %v1336 = vld [vmem:[%s1335] sm:$0xff]
  %v1337 = vld [vmem:[%s1335 + $0x8] sm:$0xff]
  %v1338 = vld [vmem:[%s1335 + $0x10] sm:$0xff]
  %v1339 = vld [vmem:[%s1335 + $0x18] sm:$0xff]
  %v1340 = vld [vmem:[%s1335 + $0x20] sm:$0xff]
  %v1341 = vld [vmem:[%s1335 + $0x28] sm:$0xff]
  %v1342 = vld [vmem:[%s1335 + $0x30] sm:$0xff]
  %v1343 = vld [vmem:[%s1335 + $0x38] sm:$0xff]
  %v1344 = vld [vmem:[%s1335 + $0x40] sm:$0xff]
  %v1345 = vld [vmem:[%s1335 + $0x48] sm:$0xff]
  %v1346 = vld [vmem:[%s1335 + $0x50] sm:$0xff]
  %v1347 = vld [vmem:[%s1335 + $0x58] sm:$0xff]
  %v1348 = vld [vmem:[%s1335 + $0x60] sm:$0xff]
  %v1349 = vld [vmem:[%s1335 + $0x68] sm:$0xff]
  %v1350 = vld [vmem:[%s1335 + $0x70] sm:$0xff]
  %v1351 = vld [vmem:[%s1335 + $0x78] sm:$0xff]
  %1352 = vmatprep.subr.mxu0 0.0
  %1353 = vmatpush1.msra.mxu0 %v1336
  %1354 = vmatprep.subr.mxu0 0.0
  %1355 = vmatpush1.msra.mxu0 %v1337
  %1356 = vmatprep.subr.mxu0 0.0
  %1357 = vmatpush1.msra.mxu0 %v1338
  %1358 = vmatprep.subr.mxu0 0.0
  %1359 = vmatpush1.msra.mxu0 %v1339
  %1360 = vmatprep.subr.mxu0 0.0
  %1361 = vmatpush1.msra.mxu0 %v1340
  %1362 = vmatprep.subr.mxu0 0.0
  %1363 = vmatpush1.msra.mxu0 %v1341
  %1364 = vmatprep.subr.mxu0 0.0
  %1365 = vmatpush1.msra.mxu0 %v1342
  %1366 = vmatprep.subr.mxu0 0.0
  %1367 = vmatpush1.msra.mxu0 %v1343
  %1368 = vmatprep.subr.mxu0 0.0
  %1369 = vmatpush1.msra.mxu0 %v1344
  %1370 = vmatprep.subr.mxu0 0.0
  %1371 = vmatpush1.msra.mxu0 %v1345
  %1372 = vmatprep.subr.mxu0 0.0
  %1373 = vmatpush1.msra.mxu0 %v1346
  %1374 = vmatprep.subr.mxu0 0.0
  %1375 = vmatpush1.msra.mxu0 %v1347
  %1376 = vmatprep.subr.mxu0 0.0
  %1377 = vmatpush1.msra.mxu0 %v1348
  %1378 = vmatprep.subr.mxu0 0.0
  %1379 = vmatpush1.msra.mxu0 %v1349
  %1380 = vmatprep.subr.mxu0 0.0
  %1381 = vmatpush1.msra.mxu0 %v1350
  %1382 = vmatprep.subr.mxu0 0.0
  %1383 = vmatpush1.msra.mxu0 %v1351
  %1384 = vmatprep.subr.mxu0 0.0
  %1385 = vmatpush1.msra.mxu0 0.0
  %1386 = vmatprep.subr.mxu0 0.0
  %1387 = vmatpush1.msra.mxu0 0.0
  %1388 = vmatprep.subr.mxu0 0.0
  %1389 = vmatpush1.msra.mxu0 0.0
  %1390 = vmatprep.subr.mxu0 0.0
  %1391 = vmatpush1.msra.mxu0 0.0
  %1392 = vmatprep.subr.mxu0 0.0
  %1393 = vmatpush1.msra.mxu0 0.0
  %1394 = vmatprep.subr.mxu0 0.0
  %1395 = vmatpush1.msra.mxu0 0.0
  %1396 = vmatprep.subr.mxu0 0.0
  %1397 = vmatpush1.msra.mxu0 0.0
  %1398 = vmatprep.subr.mxu0 0.0
  %1399 = vmatpush1.msra.mxu0 0.0
  %1400 = vmatprep.subr.mxu0 0.0
  %1401 = vmatpush1.msra.mxu0 0.0
  %1402 = vmatprep.subr.mxu0 0.0
  %1403 = vmatpush1.msra.mxu0 0.0
  %1404 = vmatprep.subr.mxu0 0.0
  %1405 = vmatpush1.msra.mxu0 0.0
  %1406 = vmatprep.subr.mxu0 0.0
  %1407 = vmatpush1.msra.mxu0 0.0
  %1408 = vmatprep.subr.mxu0 0.0
  %1409 = vmatpush1.msra.mxu0 0.0
  %1410 = vmatprep.subr.mxu0 0.0
  %1411 = vmatpush1.msra.mxu0 0.0
  %1412 = vmatprep.subr.mxu0 0.0
  %1413 = vmatpush1.msra.mxu0 0.0
  %1414 = vmatprep.subr.mxu0 0.0
  %1415 = vmatpush1.msra.mxu0 0.0
  %1416 = vmatprep.mubr.f32.mxu0 0.0
  %1417 = vmatmul.mubr.f32.gmra.mrb[0].mxu0 %v1327
  %v1418 = vpop.f32.mrb[0].mxu0
  %v1419 = vadd.f32 0.0, %v1418
  %v1420 = vpop.f32.mrb[0].mxu0
  %1421 = vmatprep.mubr.f32.mxu0 0.0
  %1422 = vmatmul.mubr.f32.gmra.mrb[0].mxu0 %v1332
  %v1423 = vpop.f32.mrb[0].mxu0
  %v1424 = vadd.f32 0.0, %v1423
  %v1425 = vpop.f32.mrb[0].mxu0
  %1426 = vdwg.mxu0
  %v1427 = vadd.f32 %v1252, %v1419
  %v1428 = vadd.f32 %v1257, %v1424
  %v1429 = vadd.f32 %v1427, %v1428
  %v1430 = vrot.slane %v1429, 4
  %v1431 = vadd.f32 %v1429, %v1430
  %v1432 = vrot.slane %v1431, 2
  %v1433 = vadd.f32 %v1431, %v1432
  %v1434 = vrot.slane %v1433, 1
  %v1435 = vadd.f32 %v1433, %v1434
  %1436 = vmatprep.subr.mxu0 0.0
  %1437 = vmatpush1.msra.mxu0 %v46
  %1438 = vmatprep.subr.mxu0 0.0
  %1439 = vmatpush1.msra.mxu0 %v47
  %1440 = vmatprep.subr.mxu0 0.0
  %1441 = vmatpush1.msra.mxu0 %v48
  %1442 = vmatprep.subr.mxu0 0.0
  %1443 = vmatpush1.msra.mxu0 %v49
  %1444 = vmatprep.subr.mxu0 0.0
  %1445 = vmatpush1.msra.mxu0 %v50
  %1446 = vmatprep.subr.mxu0 0.0
  %1447 = vmatpush1.msra.mxu0 %v51
  %1448 = vmatprep.subr.mxu0 0.0
  %1449 = vmatpush1.msra.mxu0 %v52
  %1450 = vmatprep.subr.mxu0 0.0
  %1451 = vmatpush1.msra.mxu0 %v53
  %1452 = vmatprep.subr.mxu0 0.0
  %1453 = vmatpush1.msra.mxu0 %v54
  %1454 = vmatprep.subr.mxu0 0.0
  %1455 = vmatpush1.msra.mxu0 %v55
  %1456 = vmatprep.subr.mxu0 0.0
  %1457 = vmatpush1.msra.mxu0 %v56
  %1458 = vmatprep.subr.mxu0 0.0
  %1459 = vmatpush1.msra.mxu0 %v57
  %1460 = vmatprep.subr.mxu0 0.0
  %1461 = vmatpush1.msra.mxu0 %v58
  %1462 = vmatprep.subr.mxu0 0.0
  %1463 = vmatpush1.msra.mxu0 %v59
  %1464 = vmatprep.subr.mxu0 0.0
  %1465 = vmatpush1.msra.mxu0 %v60
  %1466 = vmatprep.subr.mxu0 0.0
  %1467 = vmatpush1.msra.mxu0 %v61
  %1468 = vmatprep.subr.mxu0 0.0
  %1469 = vmatpush1.msra.mxu0 0.0
  %1470 = vmatprep.subr.mxu0 0.0
  %1471 = vmatpush1.msra.mxu0 0.0
  %1472 = vmatprep.subr.mxu0 0.0
  %1473 = vmatpush1.msra.mxu0 0.0
  %1474 = vmatprep.subr.mxu0 0.0
  %1475 = vmatpush1.msra.mxu0 0.0
  %1476 = vmatprep.subr.mxu0 0.0
  %1477 = vmatpush1.msra.mxu0 0.0
  %1478 = vmatprep.subr.mxu0 0.0
  %1479 = vmatpush1.msra.mxu0 0.0
  %1480 = vmatprep.subr.mxu0 0.0
  %1481 = vmatpush1.msra.mxu0 0.0
  %1482 = vmatprep.subr.mxu0 0.0
  %1483 = vmatpush1.msra.mxu0 0.0
  %1484 = vmatprep.subr.mxu0 0.0
  %1485 = vmatpush1.msra.mxu0 0.0
  %1486 = vmatprep.subr.mxu0 0.0
  %1487 = vmatpush1.msra.mxu0 0.0
  %1488 = vmatprep.subr.mxu0 0.0
  %1489 = vmatpush1.msra.mxu0 0.0
  %1490 = vmatprep.subr.mxu0 0.0
  %1491 = vmatpush1.msra.mxu0 0.0
  %1492 = vmatprep.subr.mxu0 0.0
  %1493 = vmatpush1.msra.mxu0 0.0
  %1494 = vmatprep.subr.mxu0 0.0
  %1495 = vmatpush1.msra.mxu0 0.0
  %1496 = vmatprep.subr.mxu0 0.0
  %1497 = vmatpush1.msra.mxu0 0.0
  %1498 = vmatprep.subr.mxu0 0.0
  %1499 = vmatpush1.msra.mxu0 0.0
  %1500 = vmatprep.mubr.f32.mxu0 0.0
  %1501 = vmatmul.mubr.f32.gmra.mrb[0].mxu0 %v1435
  %v1502 = vpop.f32.mrb[0].mxu0
  %v1503 = vadd.f32 0.0, %v1502
  %v1504 = vpop.f32.mrb[0].mxu0
  %1505 = vdwg.mxu0
  %v1506 = vmul.f32 %v1503, 0.0078125
  %v1508 = vsel %vm66, %v1506, 0
  %1510 = vmatprep.subr.mxu0 0.0
  %1511 = vmatpush1.msra.mxu0 %v62
  %1512 = vmatprep.subr.mxu0 0.0
  %1513 = vmatpush1.msra.mxu0 %v63
  %1514 = vmatprep.subr.mxu0 0.0
  %1515 = vmatpush1.msra.mxu0 0.0
  %1516 = vmatprep.subr.mxu0 0.0
  %1517 = vmatpush1.msra.mxu0 0.0
  %1518 = vmatprep.subr.mxu0 0.0
  %1519 = vmatpush1.msra.mxu0 0.0
  %1520 = vmatprep.subr.mxu0 0.0
  %1521 = vmatpush1.msra.mxu0 0.0
  %1522 = vmatprep.subr.mxu0 0.0
  %1523 = vmatpush1.msra.mxu0 0.0
  %1524 = vmatprep.subr.mxu0 0.0
  %1525 = vmatpush1.msra.mxu0 0.0
  %1526 = vmatprep.subr.mxu0 0.0
  %1527 = vmatpush1.msra.mxu0 0.0
  %1528 = vmatprep.subr.mxu0 0.0
  %1529 = vmatpush1.msra.mxu0 0.0
  %1530 = vmatprep.subr.mxu0 0.0
  %1531 = vmatpush1.msra.mxu0 0.0
  %1532 = vmatprep.subr.mxu0 0.0
  %1533 = vmatpush1.msra.mxu0 0.0
  %1534 = vmatprep.subr.mxu0 0.0
  %1535 = vmatpush1.msra.mxu0 0.0
  %1536 = vmatprep.subr.mxu0 0.0
  %1537 = vmatpush1.msra.mxu0 0.0
  %1538 = vmatprep.subr.mxu0 0.0
  %1539 = vmatpush1.msra.mxu0 0.0
  %1540 = vmatprep.subr.mxu0 0.0
  %1541 = vmatpush1.msra.mxu0 0.0
  %1542 = vmatprep.subr.mxu0 0.0
  %1543 = vmatpush1.msra.mxu0 0.0
  %1544 = vmatprep.subr.mxu0 0.0
  %1545 = vmatpush1.msra.mxu0 0.0
  %1546 = vmatprep.subr.mxu0 0.0
  %1547 = vmatpush1.msra.mxu0 0.0
  %1548 = vmatprep.subr.mxu0 0.0
  %1549 = vmatpush1.msra.mxu0 0.0
  %1550 = vmatprep.subr.mxu0 0.0
  %1551 = vmatpush1.msra.mxu0 0.0
  %1552 = vmatprep.subr.mxu0 0.0
  %1553 = vmatpush1.msra.mxu0 0.0
  %1554 = vmatprep.subr.mxu0 0.0
  %1555 = vmatpush1.msra.mxu0 0.0
  %1556 = vmatprep.subr.mxu0 0.0
  %1557 = vmatpush1.msra.mxu0 0.0
  %1558 = vmatprep.subr.mxu0 0.0
  %1559 = vmatpush1.msra.mxu0 0.0
  %1560 = vmatprep.subr.mxu0 0.0
  %1561 = vmatpush1.msra.mxu0 0.0
  %1562 = vmatprep.subr.mxu0 0.0
  %1563 = vmatpush1.msra.mxu0 0.0
  %1564 = vmatprep.subr.mxu0 0.0
  %1565 = vmatpush1.msra.mxu0 0.0
  %1566 = vmatprep.subr.mxu0 0.0
  %1567 = vmatpush1.msra.mxu0 0.0
  %1568 = vmatprep.subr.mxu0 0.0
  %1569 = vmatpush1.msra.mxu0 0.0
  %1570 = vmatprep.subr.mxu0 0.0
  %1571 = vmatpush1.msra.mxu0 0.0
  %1572 = vmatprep.subr.mxu0 0.0
  %1573 = vmatpush1.msra.mxu0 0.0
  %1574 = vmatprep.mubr.f32.mxu0 0.0
  %1575 = vmatmul.mubr.f32.gmra.mrb[0].mxu0 %v1508
  %v1576 = vpop.f32.mrb[0].mxu0
  %v1577 = vadd.f32 0.0, %v1576
  %v1578 = vpop.f32.mrb[0].mxu0
  %1579 = vdwg.mxu0
  %v1580 = vlaneseq
  %v1581 = vshrl.u32 %v1580, 7
  %v1582 = vsub.s32 0, %v1581
  %v1583 = vrot.slane %v1577, %v1582
  %v1584 = vsub.f32 %v1427, %v1583
  %v1585 = vsub.f32 %v1428, %v1583
  %v1586 = vmul.f32 %v1584, %v1584
  %v1587 = vmul.f32 %v1585, %v1585
  %v1588 = vadd.f32 %v1586, %v1587
  %v1589 = vrot.slane %v1588, 4
  %v1590 = vadd.f32 %v1588, %v1589
  %v1591 = vrot.slane %v1590, 2
  %v1592 = vadd.f32 %v1590, %v1591
  %v1593 = vrot.slane %v1592, 1
  %v1594 = vadd.f32 %v1592, %v1593
  %1595 = vmatprep.subr.mxu0 0.0
  %1596 = vmatpush1.msra.mxu0 %v46
  %1597 = vmatprep.subr.mxu0 0.0
  %1598 = vmatpush1.msra.mxu0 %v47
  %1599 = vmatprep.subr.mxu0 0.0
  %1600 = vmatpush1.msra.mxu0 %v48
  %1601 = vmatprep.subr.mxu0 0.0
  %1602 = vmatpush1.msra.mxu0 %v49
  %1603 = vmatprep.subr.mxu0 0.0
  %1604 = vmatpush1.msra.mxu0 %v50
  %1605 = vmatprep.subr.mxu0 0.0
  %1606 = vmatpush1.msra.mxu0 %v51
  %1607 = vmatprep.subr.mxu0 0.0
  %1608 = vmatpush1.msra.mxu0 %v52
  %1609 = vmatprep.subr.mxu0 0.0
  %1610 = vmatpush1.msra.mxu0 %v53
  %1611 = vmatprep.subr.mxu0 0.0
  %1612 = vmatpush1.msra.mxu0 %v54
  %1613 = vmatprep.subr.mxu0 0.0
  %1614 = vmatpush1.msra.mxu0 %v55
  %1615 = vmatprep.subr.mxu0 0.0
  %1616 = vmatpush1.msra.mxu0 %v56
  %1617 = vmatprep.subr.mxu0 0.0
  %1618 = vmatpush1.msra.mxu0 %v57
  %1619 = vmatprep.subr.mxu0 0.0
  %1620 = vmatpush1.msra.mxu0 %v58
  %1621 = vmatprep.subr.mxu0 0.0
  %1622 = vmatpush1.msra.mxu0 %v59
  %1623 = vmatprep.subr.mxu0 0.0
  %1624 = vmatpush1.msra.mxu0 %v60
  %1625 = vmatprep.subr.mxu0 0.0
  %1626 = vmatpush1.msra.mxu0 %v61
  %1627 = vmatprep.subr.mxu0 0.0
  %1628 = vmatpush1.msra.mxu0 0.0
  %1629 = vmatprep.subr.mxu0 0.0
  %1630 = vmatpush1.msra.mxu0 0.0
  %1631 = vmatprep.subr.mxu0 0.0
  %1632 = vmatpush1.msra.mxu0 0.0
  %1633 = vmatprep.subr.mxu0 0.0
  %1634 = vmatpush1.msra.mxu0 0.0
  %1635 = vmatprep.subr.mxu0 0.0
  %1636 = vmatpush1.msra.mxu0 0.0
  %1637 = vmatprep.subr.mxu0 0.0
  %1638 = vmatpush1.msra.mxu0 0.0
  %1639 = vmatprep.subr.mxu0 0.0
  %1640 = vmatpush1.msra.mxu0 0.0
  %1641 = vmatprep.subr.mxu0 0.0
  %1642 = vmatpush1.msra.mxu0 0.0
  %1643 = vmatprep.subr.mxu0 0.0
  %1644 = vmatpush1.msra.mxu0 0.0
  %1645 = vmatprep.subr.mxu0 0.0
  %1646 = vmatpush1.msra.mxu0 0.0
  %1647 = vmatprep.subr.mxu0 0.0
  %1648 = vmatpush1.msra.mxu0 0.0
  %1649 = vmatprep.subr.mxu0 0.0
  %1650 = vmatpush1.msra.mxu0 0.0
  %1651 = vmatprep.subr.mxu0 0.0
  %1652 = vmatpush1.msra.mxu0 0.0
  %1653 = vmatprep.subr.mxu0 0.0
  %1654 = vmatpush1.msra.mxu0 0.0
  %1655 = vmatprep.subr.mxu0 0.0
  %1656 = vmatpush1.msra.mxu0 0.0
  %1657 = vmatprep.subr.mxu0 0.0
  %1658 = vmatpush1.msra.mxu0 0.0
  %1659 = vmatprep.mubr.f32.mxu0 0.0
  %1660 = vmatmul.mubr.f32.gmra.mrb[0].mxu0 %v1594
  %v1661 = vpop.f32.mrb[0].mxu0
  %v1662 = vadd.f32 0.0, %v1661
  %v1663 = vpop.f32.mrb[0].mxu0
  %1664 = vdwg.mxu0
  %v1665 = vmul.f32 %v1662, 0.0078125
  %v1666 = vadd.f32 %v1665, 1e-05
  %v1667 = vrsqrt.pop %v1666
  %v1669 = vsel %vm66, %v1667, 0
  %1671 = vmatprep.subr.mxu0 0.0
  %1672 = vmatpush1.msra.mxu0 %v62
  %1673 = vmatprep.subr.mxu0 0.0
  %1674 = vmatpush1.msra.mxu0 %v63
  %1675 = vmatprep.subr.mxu0 0.0
  %1676 = vmatpush1.msra.mxu0 0.0
  %1677 = vmatprep.subr.mxu0 0.0
  %1678 = vmatpush1.msra.mxu0 0.0
  %1679 = vmatprep.subr.mxu0 0.0
  %1680 = vmatpush1.msra.mxu0 0.0
  %1681 = vmatprep.subr.mxu0 0.0
  %1682 = vmatpush1.msra.mxu0 0.0
  %1683 = vmatprep.subr.mxu0 0.0
  %1684 = vmatpush1.msra.mxu0 0.0
  %1685 = vmatprep.subr.mxu0 0.0
  %1686 = vmatpush1.msra.mxu0 0.0
  %1687 = vmatprep.subr.mxu0 0.0
  %1688 = vmatpush1.msra.mxu0 0.0
  %1689 = vmatprep.subr.mxu0 0.0
  %1690 = vmatpush1.msra.mxu0 0.0
  %1691 = vmatprep.subr.mxu0 0.0
  %1692 = vmatpush1.msra.mxu0 0.0
  %1693 = vmatprep.subr.mxu0 0.0
  %1694 = vmatpush1.msra.mxu0 0.0
  %1695 = vmatprep.subr.mxu0 0.0
  %1696 = vmatpush1.msra.mxu0 0.0
  %1697 = vmatprep.subr.mxu0 0.0
  %1698 = vmatpush1.msra.mxu0 0.0
  %1699 = vmatprep.subr.mxu0 0.0
  %1700 = vmatpush1.msra.mxu0 0.0
  %1701 = vmatprep.subr.mxu0 0.0
  %1702 = vmatpush1.msra.mxu0 0.0
  %1703 = vmatprep.subr.mxu0 0.0
  %1704 = vmatpush1.msra.mxu0 0.0
  %1705 = vmatprep.subr.mxu0 0.0
  %1706 = vmatpush1.msra.mxu0 0.0
  %1707 = vmatprep.subr.mxu0 0.0
  %1708 = vmatpush1.msra.mxu0 0.0
  %1709 = vmatprep.subr.mxu0 0.0
  %1710 = vmatpush1.msra.mxu0 0.0
  %1711 = vmatprep.subr.mxu0 0.0
  %1712 = vmatpush1.msra.mxu0 0.0
  %1713 = vmatprep.subr.mxu0 0.0
  %1714 = vmatpush1.msra.mxu0 0.0
  %1715 = vmatprep.subr.mxu0 0.0
  %1716 = vmatpush1.msra.mxu0 0.0
  %1717 = vmatprep.subr.mxu0 0.0
  %1718 = vmatpush1.msra.mxu0 0.0
  %1719 = vmatprep.subr.mxu0 0.0
  %1720 = vmatpush1.msra.mxu0 0.0
  %1721 = vmatprep.subr.mxu0 0.0
  %1722 = vmatpush1.msra.mxu0 0.0
  %1723 = vmatprep.subr.mxu0 0.0
  %1724 = vmatpush1.msra.mxu0 0.0
  %1725 = vmatprep.subr.mxu0 0.0
  %1726 = vmatpush1.msra.mxu0 0.0
  %1727 = vmatprep.subr.mxu0 0.0
  %1728 = vmatpush1.msra.mxu0 0.0
  %1729 = vmatprep.subr.mxu0 0.0
  %1730 = vmatpush1.msra.mxu0 0.0
  %1731 = vmatprep.subr.mxu0 0.0
  %1732 = vmatpush1.msra.mxu0 0.0
  %1733 = vmatprep.subr.mxu0 0.0
  %1734 = vmatpush1.msra.mxu0 0.0
  %1735 = vmatprep.mubr.f32.mxu0 0.0
  %1736 = vmatmul.mubr.f32.gmra.mrb[0].mxu0 %v1669
  %v1737 = vpop.f32.mrb[0].mxu0
  %v1738 = vadd.f32 0.0, %v1737
  %v1739 = vpop.f32.mrb[0].mxu0
  %1740 = vdwg.mxu0
  %v1741 = vlaneseq
  %v1742 = vshrl.u32 %v1741, 7
  %v1743 = vsub.s32 0, %v1742
  %v1744 = vrot.slane %v1738, %v1743
  %v1745 = vmul.f32 %v1584, %v1744
  %v1746 = vmul.f32 %v1585, %v1744
  %v1747 = vld [vmem:[%s4 + $0x1] sm:$0x1]
  %v1748 = vlaneseq
  %v1749 = vshrl.u32 %v1748, 7
  %v1750 = vsub.s32 0, %v1749
  %v1751 = vrot.slane %v1747, %v1750
  %v1752 = vmul.f32 %v1745, %v1751
  %v1753 = vmul.f32 %v1746, %v1751
  %v1754 = vld [vmem:[%s5 + $0x1] sm:$0x1]
  %v1755 = vlaneseq
  %v1756 = vshrl.u32 %v1755, 7
  %v1757 = vsub.s32 0, %v1756
  %v1758 = vrot.slane %v1754, %v1757
  %v1759 = vadd.f32 %v1752, %v1758
  %v1760 = vadd.f32 %v1753, %v1758
  %v1761 = vmax.f32 %v1759, 0.0
  %v1762 = vmax.f32 %v1760, 0.0
  %1763 = vmatprep.subr.mxu0 0.0
  %1764 = vmatpush1.msra.mxu0 %v1761
  %1765 = vmatprep.subr.mxu0 0.0
  %1766 = vmatpush1.msra.mxu0 %v1762
  %1767 = vmatprep.subr.mxu0 0.0
  %1768 = vmatpush1.msra.mxu0 0.0
  %1769 = vmatprep.subr.mxu0 0.0
  %1770 = vmatpush1.msra.mxu0 0.0
  %1771 = vmatprep.subr.mxu0 0.0
  %1772 = vmatpush1.msra.mxu0 0.0
  %1773 = vmatprep.subr.mxu0 0.0
  %1774 = vmatpush1.msra.mxu0 0.0
  %1775 = vmatprep.subr.mxu0 0.0
  %1776 = vmatpush1.msra.mxu0 0.0
  %1777 = vmatprep.subr.mxu0 0.0
  %1778 = vmatpush1.msra.mxu0 0.0
  %1779 = vmatprep.subr.mxu0 0.0
  %1780 = vmatpush1.msra.mxu0 0.0
  %1781 = vmatprep.subr.mxu0 0.0
  %1782 = vmatpush1.msra.mxu0 0.0
  %1783 = vmatprep.subr.mxu0 0.0
  %1784 = vmatpush1.msra.mxu0 0.0
  %1785 = vmatprep.subr.mxu0 0.0
  %1786 = vmatpush1.msra.mxu0 0.0
  %1787 = vmatprep.subr.mxu0 0.0
  %1788 = vmatpush1.msra.mxu0 0.0
  %1789 = vmatprep.subr.mxu0 0.0
  %1790 = vmatpush1.msra.mxu0 0.0
  %1791 = vmatprep.subr.mxu0 0.0
  %1792 = vmatpush1.msra.mxu0 0.0
  %1793 = vmatprep.subr.mxu0 0.0
  %1794 = vmatpush1.msra.mxu0 0.0
  %1795 = vmatprep.subr.mxu0 0.0
  %1796 = vmatpush1.msra.mxu0 0.0
  %1797 = vmatprep.subr.mxu0 0.0
  %1798 = vmatpush1.msra.mxu0 0.0
  %1799 = vmatprep.subr.mxu0 0.0
  %1800 = vmatpush1.msra.mxu0 0.0
  %1801 = vmatprep.subr.mxu0 0.0
  %1802 = vmatpush1.msra.mxu0 0.0
  %1803 = vmatprep.subr.mxu0 0.0
  %1804 = vmatpush1.msra.mxu0 0.0
  %1805 = vmatprep.subr.mxu0 0.0
  %1806 = vmatpush1.msra.mxu0 0.0
  %1807 = vmatprep.subr.mxu0 0.0
  %1808 = vmatpush1.msra.mxu0 0.0
  %1809 = vmatprep.subr.mxu0 0.0
  %1810 = vmatpush1.msra.mxu0 0.0
  %1811 = vmatprep.subr.mxu0 0.0
  %1812 = vmatpush1.msra.mxu0 0.0
  %1813 = vmatprep.subr.mxu0 0.0
  %1814 = vmatpush1.msra.mxu0 0.0
  %1815 = vmatprep.subr.mxu0 0.0
  %1816 = vmatpush1.msra.mxu0 0.0
  %1817 = vmatprep.subr.mxu0 0.0
  %1818 = vmatpush1.msra.mxu0 0.0
  %1819 = vmatprep.subr.mxu0 0.0
  %1820 = vmatpush1.msra.mxu0 0.0
  %1821 = vmatprep.subr.mxu0 0.0
  %1822 = vmatpush1.msra.mxu0 0.0
  %1823 = vmatprep.subr.mxu0 0.0
  %1824 = vmatpush1.msra.mxu0 0.0
  %1825 = vmatprep.subr.mxu0 0.0
  %1826 = vmatpush1.msra.mxu0 0.0
  %1827 = vmatprep.mubr.f32.mxu0 0.0
  %1828 = vmatmul.mubr.f32.gmra.mrb[0].mxu0 %v68
  %v1829 = vpop.f32.mrb[0].mxu0
  %v1830 = vadd.f32 0.0, %v1829
  %v1831 = vpop.f32.mrb[0].mxu0
  %1832 = vmatprep.mubr.f32.mxu0 0.0
  %1833 = vmatmul.mubr.f32.gmra.mrb[0].mxu0 %v71
  %v1834 = vpop.f32.mrb[0].mxu0
  %v1835 = vadd.f32 0.0, %v1834
  %v1836 = vpop.f32.mrb[0].mxu0
  %1837 = vdwg.mxu0
  %1838 = vmatprep.subr.mxu0 0.0
  %1839 = vmatpush1.msra.mxu0 %v1761
  %1840 = vmatprep.subr.mxu0 0.0
  %1841 = vmatpush1.msra.mxu0 %v1762
  %1842 = vmatprep.subr.mxu0 0.0
  %1843 = vmatpush1.msra.mxu0 0.0
  %1844 = vmatprep.subr.mxu0 0.0
  %1845 = vmatpush1.msra.mxu0 0.0
  %1846 = vmatprep.subr.mxu0 0.0
  %1847 = vmatpush1.msra.mxu0 0.0
  %1848 = vmatprep.subr.mxu0 0.0
  %1849 = vmatpush1.msra.mxu0 0.0
  %1850 = vmatprep.subr.mxu0 0.0
  %1851 = vmatpush1.msra.mxu0 0.0
  %1852 = vmatprep.subr.mxu0 0.0
  %1853 = vmatpush1.msra.mxu0 0.0
  %1854 = vmatprep.subr.mxu0 0.0
  %1855 = vmatpush1.msra.mxu0 0.0
  %1856 = vmatprep.subr.mxu0 0.0
  %1857 = vmatpush1.msra.mxu0 0.0
  %1858 = vmatprep.subr.mxu0 0.0
  %1859 = vmatpush1.msra.mxu0 0.0
  %1860 = vmatprep.subr.mxu0 0.0
  %1861 = vmatpush1.msra.mxu0 0.0
  %1862 = vmatprep.subr.mxu0 0.0
  %1863 = vmatpush1.msra.mxu0 0.0
  %1864 = vmatprep.subr.mxu0 0.0
  %1865 = vmatpush1.msra.mxu0 0.0
  %1866 = vmatprep.subr.mxu0 0.0
  %1867 = vmatpush1.msra.mxu0 0.0
  %1868 = vmatprep.subr.mxu0 0.0
  %1869 = vmatpush1.msra.mxu0 0.0
  %1870 = vmatprep.subr.mxu0 0.0
  %1871 = vmatpush1.msra.mxu0 0.0
  %1872 = vmatprep.subr.mxu0 0.0
  %1873 = vmatpush1.msra.mxu0 0.0
  %1874 = vmatprep.subr.mxu0 0.0
  %1875 = vmatpush1.msra.mxu0 0.0
  %1876 = vmatprep.subr.mxu0 0.0
  %1877 = vmatpush1.msra.mxu0 0.0
  %1878 = vmatprep.subr.mxu0 0.0
  %1879 = vmatpush1.msra.mxu0 0.0
  %1880 = vmatprep.subr.mxu0 0.0
  %1881 = vmatpush1.msra.mxu0 0.0
  %1882 = vmatprep.subr.mxu0 0.0
  %1883 = vmatpush1.msra.mxu0 0.0
  %1884 = vmatprep.subr.mxu0 0.0
  %1885 = vmatpush1.msra.mxu0 0.0
  %1886 = vmatprep.subr.mxu0 0.0
  %1887 = vmatpush1.msra.mxu0 0.0
  %1888 = vmatprep.subr.mxu0 0.0
  %1889 = vmatpush1.msra.mxu0 0.0
  %1890 = vmatprep.subr.mxu0 0.0
  %1891 = vmatpush1.msra.mxu0 0.0
  %1892 = vmatprep.subr.mxu0 0.0
  %1893 = vmatpush1.msra.mxu0 0.0
  %1894 = vmatprep.subr.mxu0 0.0
  %1895 = vmatpush1.msra.mxu0 0.0
  %1896 = vmatprep.subr.mxu0 0.0
  %1897 = vmatpush1.msra.mxu0 0.0
  %1898 = vmatprep.subr.mxu0 0.0
  %1899 = vmatpush1.msra.mxu0 0.0
  %1900 = vmatprep.subr.mxu0 0.0
  %1901 = vmatpush1.msra.mxu0 0.0
  %1902 = vmatprep.mubr.f32.mxu0 0.0
  %1903 = vmatmul.mubr.f32.gmra.mrb[0].mxu0 %v168
  %v1904 = vpop.f32.mrb[0].mxu0
  %v1905 = vadd.f32 0.0, %v1904
  %v1906 = vpop.f32.mrb[0].mxu0
  %1907 = vmatprep.mubr.f32.mxu0 0.0
  %1908 = vmatmul.mubr.f32.gmra.mrb[0].mxu0 %v171
  %v1909 = vpop.f32.mrb[0].mxu0
  %v1910 = vadd.f32 0.0, %v1909
  %v1911 = vpop.f32.mrb[0].mxu0
  %1912 = vdwg.mxu0
  %1913 = vmatprep.subr.mxu0 0.0
  %1914 = vmatpush1.msra.mxu0 %v1094
  %1915 = vmatprep.subr.mxu0 0.0
  %1916 = vmatpush1.msra.mxu0 %v1095
  %1917 = vmatprep.subr.mxu0 0.0
  %1918 = vmatpush1.msra.mxu0 %v1096
  %1919 = vmatprep.subr.mxu0 0.0
  %1920 = vmatpush1.msra.mxu0 %v1097
  %1921 = vmatprep.subr.mxu0 0.0
  %1922 = vmatpush1.msra.mxu0 %v1098
  %1923 = vmatprep.subr.mxu0 0.0
  %1924 = vmatpush1.msra.mxu0 %v1099
  %1925 = vmatprep.subr.mxu0 0.0
  %1926 = vmatpush1.msra.mxu0 %v1100
  %1927 = vmatprep.subr.mxu0 0.0
  %1928 = vmatpush1.msra.mxu0 %v1101
  %1929 = vmatprep.subr.mxu0 0.0
  %1930 = vmatpush1.msra.mxu0 %v1102
  %1931 = vmatprep.subr.mxu0 0.0
  %1932 = vmatpush1.msra.mxu0 %v1103
  %1933 = vmatprep.subr.mxu0 0.0
  %1934 = vmatpush1.msra.mxu0 %v1104
  %1935 = vmatprep.subr.mxu0 0.0
  %1936 = vmatpush1.msra.mxu0 %v1105
  %1937 = vmatprep.subr.mxu0 0.0
  %1938 = vmatpush1.msra.mxu0 %v1106
  %1939 = vmatprep.subr.mxu0 0.0
  %1940 = vmatpush1.msra.mxu0 %v1107
  %1941 = vmatprep.subr.mxu0 0.0
  %1942 = vmatpush1.msra.mxu0 %v1108
  %1943 = vmatprep.subr.mxu0 0.0
  %1944 = vmatpush1.msra.mxu0 %v1109
  %1945 = vmatprep.subr.mxu0 0.0
  %1946 = vmatpush1.msra.mxu0 0.0
  %1947 = vmatprep.subr.mxu0 0.0
  %1948 = vmatpush1.msra.mxu0 0.0
  %1949 = vmatprep.subr.mxu0 0.0
  %1950 = vmatpush1.msra.mxu0 0.0
  %1951 = vmatprep.subr.mxu0 0.0
  %1952 = vmatpush1.msra.mxu0 0.0
  %1953 = vmatprep.subr.mxu0 0.0
  %1954 = vmatpush1.msra.mxu0 0.0
  %1955 = vmatprep.subr.mxu0 0.0
  %1956 = vmatpush1.msra.mxu0 0.0
  %1957 = vmatprep.subr.mxu0 0.0
  %1958 = vmatpush1.msra.mxu0 0.0
  %1959 = vmatprep.subr.mxu0 0.0
  %1960 = vmatpush1.msra.mxu0 0.0
  %1961 = vmatprep.subr.mxu0 0.0
  %1962 = vmatpush1.msra.mxu0 0.0
  %1963 = vmatprep.subr.mxu0 0.0
  %1964 = vmatpush1.msra.mxu0 0.0
  %1965 = vmatprep.subr.mxu0 0.0
  %1966 = vmatpush1.msra.mxu0 0.0
  %1967 = vmatprep.subr.mxu0 0.0
  %1968 = vmatpush1.msra.mxu0 0.0
  %1969 = vmatprep.subr.mxu0 0.0
  %1970 = vmatpush1.msra.mxu0 0.0
  %1971 = vmatprep.subr.mxu0 0.0
  %1972 = vmatpush1.msra.mxu0 0.0
  %1973 = vmatprep.subr.mxu0 0.0
  %1974 = vmatpush1.msra.mxu0 0.0
  %1975 = vmatprep.subr.mxu0 0.0
  %1976 = vmatpush1.msra.mxu0 0.0
  %1977 = vmatprep.mubr.f32.mxu0 0.0
  %1978 = vmatmul.mubr.f32.gmra.mrb[0].mxu0 %v1905
  %v1979 = vpop.f32.mrb[0].mxu0
  %v1980 = vadd.f32 0.0, %v1979
  %v1981 = vpop.f32.mrb[0].mxu0
  %1982 = vmatprep.mubr.f32.mxu0 0.0
  %1983 = vmatmul.mubr.f32.gmra.mrb[0].mxu0 %v1910
  %v1984 = vpop.f32.mrb[0].mxu0
  %v1985 = vadd.f32 0.0, %v1984
  %v1986 = vpop.f32.mrb[0].mxu0
  %1987 = vdwg.mxu0
  %1988 = vmatprep.subr.mxu0 0.0
  %1989 = vmatpush1.msra.mxu0 %v1002
  %1990 = vmatprep.subr.mxu0 0.0
  %1991 = vmatpush1.msra.mxu0 %v1003
  %1992 = vmatprep.subr.mxu0 0.0
  %1993 = vmatpush1.msra.mxu0 %v1004
  %1994 = vmatprep.subr.mxu0 0.0
  %1995 = vmatpush1.msra.mxu0 %v1005
  %1996 = vmatprep.subr.mxu0 0.0
  %1997 = vmatpush1.msra.mxu0 %v1006
  %1998 = vmatprep.subr.mxu0 0.0
  %1999 = vmatpush1.msra.mxu0 %v1007
  %2000 = vmatprep.subr.mxu0 0.0
  %2001 = vmatpush1.msra.mxu0 %v1008
  %2002 = vmatprep.subr.mxu0 0.0
  %2003 = vmatpush1.msra.mxu0 %v1009
  %2004 = vmatprep.subr.mxu0 0.0
  %2005 = vmatpush1.msra.mxu0 %v1010
  %2006 = vmatprep.subr.mxu0 0.0
  %2007 = vmatpush1.msra.mxu0 %v1011
  %2008 = vmatprep.subr.mxu0 0.0
  %2009 = vmatpush1.msra.mxu0 %v1012
  %2010 = vmatprep.subr.mxu0 0.0
  %2011 = vmatpush1.msra.mxu0 %v1013
  %2012 = vmatprep.subr.mxu0 0.0
  %2013 = vmatpush1.msra.mxu0 %v1014
  %2014 = vmatprep.subr.mxu0 0.0
  %2015 = vmatpush1.msra.mxu0 %v1015
  %2016 = vmatprep.subr.mxu0 0.0
  %2017 = vmatpush1.msra.mxu0 %v1016
  %2018 = vmatprep.subr.mxu0 0.0
  %2019 = vmatpush1.msra.mxu0 %v1017
  %2020 = vmatprep.subr.mxu0 0.0
  %2021 = vmatpush1.msra.mxu0 0.0
  %2022 = vmatprep.subr.mxu0 0.0
  %2023 = vmatpush1.msra.mxu0 0.0
  %2024 = vmatprep.subr.mxu0 0.0
  %2025 = vmatpush1.msra.mxu0 0.0
  %2026 = vmatprep.subr.mxu0 0.0
  %2027 = vmatpush1.msra.mxu0 0.0
  %2028 = vmatprep.subr.mxu0 0.0
  %2029 = vmatpush1.msra.mxu0 0.0
  %2030 = vmatprep.subr.mxu0 0.0
  %2031 = vmatpush1.msra.mxu0 0.0
  %2032 = vmatprep.subr.mxu0 0.0
  %2033 = vmatpush1.msra.mxu0 0.0
  %2034 = vmatprep.subr.mxu0 0.0
  %2035 = vmatpush1.msra.mxu0 0.0
  %2036 = vmatprep.subr.mxu0 0.0
  %2037 = vmatpush1.msra.mxu0 0.0
  %2038 = vmatprep.subr.mxu0 0.0
  %2039 = vmatpush1.msra.mxu0 0.0
  %2040 = vmatprep.subr.mxu0 0.0
  %2041 = vmatpush1.msra.mxu0 0.0
  %2042 = vmatprep.subr.mxu0 0.0
  %2043 = vmatpush1.msra.mxu0 0.0
  %2044 = vmatprep.subr.mxu0 0.0
  %2045 = vmatpush1.msra.mxu0 0.0
  %2046 = vmatprep.subr.mxu0 0.0
  %2047 = vmatpush1.msra.mxu0 0.0
  %2048 = vmatprep.subr.mxu0 0.0
  %2049 = vmatpush1.msra.mxu0 0.0
  %2050 = vmatprep.subr.mxu0 0.0
  %2051 = vmatpush1.msra.mxu0 0.0
  %2052 = vmatprep.mubr.f32.mxu0 0.0
  %2053 = vmatmul.mubr.f32.gmra.mrb[0].mxu0 %v1830
  %v2054 = vpop.f32.mrb[0].mxu0
  %v2055 = vadd.f32 %v1980, %v2054
  %v2056 = vpop.f32.mrb[0].mxu0
  %2057 = vmatprep.mubr.f32.mxu0 0.0
  %2058 = vmatmul.mubr.f32.gmra.mrb[0].mxu0 %v1835
  %v2059 = vpop.f32.mrb[0].mxu0
  %v2060 = vadd.f32 %v1985, %v2059
  %v2061 = vpop.f32.mrb[0].mxu0
  %2062 = vdwg.mxu0
  %2063 = vmatprep.subr.mxu0 0.0
  %2064 = vmatpush1.msra.mxu0 %v1761
  %2065 = vmatprep.subr.mxu0 0.0
  %2066 = vmatpush1.msra.mxu0 %v1762
  %2067 = vmatprep.subr.mxu0 0.0
  %2068 = vmatpush1.msra.mxu0 0.0
  %2069 = vmatprep.subr.mxu0 0.0
  %2070 = vmatpush1.msra.mxu0 0.0
  %2071 = vmatprep.subr.mxu0 0.0
  %2072 = vmatpush1.msra.mxu0 0.0
  %2073 = vmatprep.subr.mxu0 0.0
  %2074 = vmatpush1.msra.mxu0 0.0
  %2075 = vmatprep.subr.mxu0 0.0
  %2076 = vmatpush1.msra.mxu0 0.0
  %2077 = vmatprep.subr.mxu0 0.0
  %2078 = vmatpush1.msra.mxu0 0.0
  %2079 = vmatprep.subr.mxu0 0.0
  %2080 = vmatpush1.msra.mxu0 0.0
  %2081 = vmatprep.subr.mxu0 0.0
  %2082 = vmatpush1.msra.mxu0 0.0
  %2083 = vmatprep.subr.mxu0 0.0
  %2084 = vmatpush1.msra.mxu0 0.0
  %2085 = vmatprep.subr.mxu0 0.0
  %2086 = vmatpush1.msra.mxu0 0.0
  %2087 = vmatprep.subr.mxu0 0.0
  %2088 = vmatpush1.msra.mxu0 0.0
  %2089 = vmatprep.subr.mxu0 0.0
  %2090 = vmatpush1.msra.mxu0 0.0
  %2091 = vmatprep.subr.mxu0 0.0
  %2092 = vmatpush1.msra.mxu0 0.0
  %2093 = vmatprep.subr.mxu0 0.0
  %2094 = vmatpush1.msra.mxu0 0.0
  %2095 = vmatprep.subr.mxu0 0.0
  %2096 = vmatpush1.msra.mxu0 0.0
  %2097 = vmatprep.subr.mxu0 0.0
  %2098 = vmatpush1.msra.mxu0 0.0
  %2099 = vmatprep.subr.mxu0 0.0
  %2100 = vmatpush1.msra.mxu0 0.0
  %2101 = vmatprep.subr.mxu0 0.0
  %2102 = vmatpush1.msra.mxu0 0.0
  %2103 = vmatprep.subr.mxu0 0.0
  %2104 = vmatpush1.msra.mxu0 0.0
  %2105 = vmatprep.subr.mxu0 0.0
  %2106 = vmatpush1.msra.mxu0 0.0
  %2107 = vmatprep.subr.mxu0 0.0
  %2108 = vmatpush1.msra.mxu0 0.0
  %2109 = vmatprep.subr.mxu0 0.0
  %2110 = vmatpush1.msra.mxu0 0.0
  %2111 = vmatprep.subr.mxu0 0.0
  %2112 = vmatpush1.msra.mxu0 0.0
  %2113 = vmatprep.subr.mxu0 0.0
  %2114 = vmatpush1.msra.mxu0 0.0
  %2115 = vmatprep.subr.mxu0 0.0
  %2116 = vmatpush1.msra.mxu0 0.0
  %2117 = vmatprep.subr.mxu0 0.0
  %2118 = vmatpush1.msra.mxu0 0.0
  %2119 = vmatprep.subr.mxu0 0.0
  %2120 = vmatpush1.msra.mxu0 0.0
  %2121 = vmatprep.subr.mxu0 0.0
  %2122 = vmatpush1.msra.mxu0 0.0
  %2123 = vmatprep.subr.mxu0 0.0
  %2124 = vmatpush1.msra.mxu0 0.0
  %2125 = vmatprep.subr.mxu0 0.0
  %2126 = vmatpush1.msra.mxu0 0.0
  %2127 = vmatprep.mubr.f32.mxu0 0.0
  %2128 = vmatmul.mubr.f32.gmra.mrb[0].mxu0 %v419
  %v2129 = vpop.f32.mrb[0].mxu0
  %v2130 = vadd.f32 0.0, %v2129
  %v2131 = vpop.f32.mrb[0].mxu0
  %2132 = vmatprep.mubr.f32.mxu0 0.0
  %2133 = vmatmul.mubr.f32.gmra.mrb[0].mxu0 %v422
  %v2134 = vpop.f32.mrb[0].mxu0
  %v2135 = vadd.f32 0.0, %v2134
  %v2136 = vpop.f32.mrb[0].mxu0
  %2137 = vdwg.mxu0
  %2138 = vmatprep.subr.mxu0 0.0
  %2139 = vmatpush1.msra.mxu0 %v1336
  %2140 = vmatprep.subr.mxu0 0.0
  %2141 = vmatpush1.msra.mxu0 %v1337
  %2142 = vmatprep.subr.mxu0 0.0
  %2143 = vmatpush1.msra.mxu0 %v1338
  %2144 = vmatprep.subr.mxu0 0.0
  %2145 = vmatpush1.msra.mxu0 %v1339
  %2146 = vmatprep.subr.mxu0 0.0
  %2147 = vmatpush1.msra.mxu0 %v1340
  %2148 = vmatprep.subr.mxu0 0.0
  %2149 = vmatpush1.msra.mxu0 %v1341
  %2150 = vmatprep.subr.mxu0 0.0
  %2151 = vmatpush1.msra.mxu0 %v1342
  %2152 = vmatprep.subr.mxu0 0.0
  %2153 = vmatpush1.msra.mxu0 %v1343
  %2154 = vmatprep.subr.mxu0 0.0
  %2155 = vmatpush1.msra.mxu0 %v1344
  %2156 = vmatprep.subr.mxu0 0.0
  %2157 = vmatpush1.msra.mxu0 %v1345
  %2158 = vmatprep.subr.mxu0 0.0
  %2159 = vmatpush1.msra.mxu0 %v1346
  %2160 = vmatprep.subr.mxu0 0.0
  %2161 = vmatpush1.msra.mxu0 %v1347
  %2162 = vmatprep.subr.mxu0 0.0
  %2163 = vmatpush1.msra.mxu0 %v1348
  %2164 = vmatprep.subr.mxu0 0.0
  %2165 = vmatpush1.msra.mxu0 %v1349
  %2166 = vmatprep.subr.mxu0 0.0
  %2167 = vmatpush1.msra.mxu0 %v1350
  %2168 = vmatprep.subr.mxu0 0.0
  %2169 = vmatpush1.msra.mxu0 %v1351
  %2170 = vmatprep.subr.mxu0 0.0
  %2171 = vmatpush1.msra.mxu0 0.0
  %2172 = vmatprep.subr.mxu0 0.0
  %2173 = vmatpush1.msra.mxu0 0.0
  %2174 = vmatprep.subr.mxu0 0.0
  %2175 = vmatpush1.msra.mxu0 0.0
  %2176 = vmatprep.subr.mxu0 0.0
  %2177 = vmatpush1.msra.mxu0 0.0
  %2178 = vmatprep.subr.mxu0 0.0
  %2179 = vmatpush1.msra.mxu0 0.0
  %2180 = vmatprep.subr.mxu0 0.0
  %2181 = vmatpush1.msra.mxu0 0.0
  %2182 = vmatprep.subr.mxu0 0.0
  %2183 = vmatpush1.msra.mxu0 0.0
  %2184 = vmatprep.subr.mxu0 0.0
  %2185 = vmatpush1.msra.mxu0 0.0
  %2186 = vmatprep.subr.mxu0 0.0
  %2187 = vmatpush1.msra.mxu0 0.0
  %2188 = vmatprep.subr.mxu0 0.0
  %2189 = vmatpush1.msra.mxu0 0.0
  %2190 = vmatprep.subr.mxu0 0.0
  %2191 = vmatpush1.msra.mxu0 0.0
  %2192 = vmatprep.subr.mxu0 0.0
  %2193 = vmatpush1.msra.mxu0 0.0
  %2194 = vmatprep.subr.mxu0 0.0
  %2195 = vmatpush1.msra.mxu0 0.0
  %2196 = vmatprep.subr.mxu0 0.0
  %2197 = vmatpush1.msra.mxu0 0.0
  %2198 = vmatprep.subr.mxu0 0.0
  %2199 = vmatpush1.msra.mxu0 0.0
  %2200 = vmatprep.subr.mxu0 0.0
  %2201 = vmatpush1.msra.mxu0 0.0
  %2202 = vmatprep.mubr.f32.mxu0 0.0
  %2203 = vmatmul.mubr.f32.gmra.mrb[0].mxu0 %v2130
  %v2204 = vpop.f32.mrb[0].mxu0
  %v2205 = vadd.f32 0.0, %v2204
  %v2206 = vpop.f32.mrb[0].mxu0
  %2207 = vmatprep.mubr.f32.mxu0 0.0
  %2208 = vmatmul.mubr.f32.gmra.mrb[0].mxu0 %v2135
  %v2209 = vpop.f32.mrb[0].mxu0
  %v2210 = vadd.f32 0.0, %v2209
  %v2211 = vpop.f32.mrb[0].mxu0
  %2212 = vdwg.mxu0
  %v2213 = vadd.f32 %v2055, %v2205
  %v2214 = vadd.f32 %v2060, %v2210
  %v2215 = vadd.f32 %v2213, %v2214
  %v2216 = vrot.slane %v2215, 4
  %v2217 = vadd.f32 %v2215, %v2216
  %v2218 = vrot.slane %v2217, 2
  %v2219 = vadd.f32 %v2217, %v2218
  %v2220 = vrot.slane %v2219, 1
  %v2221 = vadd.f32 %v2219, %v2220
  %2222 = vmatprep.subr.mxu0 0.0
  %2223 = vmatpush1.msra.mxu0 %v46
  %2224 = vmatprep.subr.mxu0 0.0
  %2225 = vmatpush1.msra.mxu0 %v47
  %2226 = vmatprep.subr.mxu0 0.0
  %2227 = vmatpush1.msra.mxu0 %v48
  %2228 = vmatprep.subr.mxu0 0.0
  %2229 = vmatpush1.msra.mxu0 %v49
  %2230 = vmatprep.subr.mxu0 0.0
  %2231 = vmatpush1.msra.mxu0 %v50
  %2232 = vmatprep.subr.mxu0 0.0
  %2233 = vmatpush1.msra.mxu0 %v51
  %2234 = vmatprep.subr.mxu0 0.0
  %2235 = vmatpush1.msra.mxu0 %v52
  %2236 = vmatprep.subr.mxu0 0.0
  %2237 = vmatpush1.msra.mxu0 %v53
  %2238 = vmatprep.subr.mxu0 0.0
  %2239 = vmatpush1.msra.mxu0 %v54
  %2240 = vmatprep.subr.mxu0 0.0
  %2241 = vmatpush1.msra.mxu0 %v55
  %2242 = vmatprep.subr.mxu0 0.0
  %2243 = vmatpush1.msra.mxu0 %v56
  %2244 = vmatprep.subr.mxu0 0.0
  %2245 = vmatpush1.msra.mxu0 %v57
  %2246 = vmatprep.subr.mxu0 0.0
  %2247 = vmatpush1.msra.mxu0 %v58
  %2248 = vmatprep.subr.mxu0 0.0
  %2249 = vmatpush1.msra.mxu0 %v59
  %2250 = vmatprep.subr.mxu0 0.0
  %2251 = vmatpush1.msra.mxu0 %v60
  %2252 = vmatprep.subr.mxu0 0.0
  %2253 = vmatpush1.msra.mxu0 %v61
  %2254 = vmatprep.subr.mxu0 0.0
  %2255 = vmatpush1.msra.mxu0 0.0
  %2256 = vmatprep.subr.mxu0 0.0
  %2257 = vmatpush1.msra.mxu0 0.0
  %2258 = vmatprep.subr.mxu0 0.0
  %2259 = vmatpush1.msra.mxu0 0.0
  %2260 = vmatprep.subr.mxu0 0.0
  %2261 = vmatpush1.msra.mxu0 0.0
  %2262 = vmatprep.subr.mxu0 0.0
  %2263 = vmatpush1.msra.mxu0 0.0
  %2264 = vmatprep.subr.mxu0 0.0
  %2265 = vmatpush1.msra.mxu0 0.0
  %2266 = vmatprep.subr.mxu0 0.0
  %2267 = vmatpush1.msra.mxu0 0.0
  %2268 = vmatprep.subr.mxu0 0.0
  %2269 = vmatpush1.msra.mxu0 0.0
  %2270 = vmatprep.subr.mxu0 0.0
  %2271 = vmatpush1.msra.mxu0 0.0
  %2272 = vmatprep.subr.mxu0 0.0
  %2273 = vmatpush1.msra.mxu0 0.0
  %2274 = vmatprep.subr.mxu0 0.0
  %2275 = vmatpush1.msra.mxu0 0.0
  %2276 = vmatprep.subr.mxu0 0.0
  %2277 = vmatpush1.msra.mxu0 0.0
  %2278 = vmatprep.subr.mxu0 0.0
  %2279 = vmatpush1.msra.mxu0 0.0
  %2280 = vmatprep.subr.mxu0 0.0
  %2281 = vmatpush1.msra.mxu0 0.0
  %2282 = vmatprep.subr.mxu0 0.0
  %2283 = vmatpush1.msra.mxu0 0.0
  %2284 = vmatprep.subr.mxu0 0.0
  %2285 = vmatpush1.msra.mxu0 0.0
  %2286 = vmatprep.mubr.f32.mxu0 0.0
  %2287 = vmatmul.mubr.f32.gmra.mrb[0].mxu0 %v2221
  %v2288 = vpop.f32.mrb[0].mxu0
  %v2289 = vadd.f32 0.0, %v2288
  %v2290 = vpop.f32.mrb[0].mxu0
  %2291 = vdwg.mxu0
  %v2292 = vmul.f32 %v2289, 0.0078125
  %v2294 = vsel %vm66, %v2292, 0
  %2296 = vmatprep.subr.mxu0 0.0
  %2297 = vmatpush1.msra.mxu0 %v62
  %2298 = vmatprep.subr.mxu0 0.0
  %2299 = vmatpush1.msra.mxu0 %v63
  %2300 = vmatprep.subr.mxu0 0.0
  %2301 = vmatpush1.msra.mxu0 0.0
  %2302 = vmatprep.subr.mxu0 0.0
  %2303 = vmatpush1.msra.mxu0 0.0
  %2304 = vmatprep.subr.mxu0 0.0
  %2305 = vmatpush1.msra.mxu0 0.0
  %2306 = vmatprep.subr.mxu0 0.0
  %2307 = vmatpush1.msra.mxu0 0.0
  %2308 = vmatprep.subr.mxu0 0.0
  %2309 = vmatpush1.msra.mxu0 0.0
  %2310 = vmatprep.subr.mxu0 0.0
  %2311 = vmatpush1.msra.mxu0 0.0
  %2312 = vmatprep.subr.mxu0 0.0
  %2313 = vmatpush1.msra.mxu0 0.0
  %2314 = vmatprep.subr.mxu0 0.0
  %2315 = vmatpush1.msra.mxu0 0.0
  %2316 = vmatprep.subr.mxu0 0.0
  %2317 = vmatpush1.msra.mxu0 0.0
  %2318 = vmatprep.subr.mxu0 0.0
  %2319 = vmatpush1.msra.mxu0 0.0
  %2320 = vmatprep.subr.mxu0 0.0
  %2321 = vmatpush1.msra.mxu0 0.0
  %2322 = vmatprep.subr.mxu0 0.0
  %2323 = vmatpush1.msra.mxu0 0.0
  %2324 = vmatprep.subr.mxu0 0.0
  %2325 = vmatpush1.msra.mxu0 0.0
  %2326 = vmatprep.subr.mxu0 0.0
  %2327 = vmatpush1.msra.mxu0 0.0
  %2328 = vmatprep.subr.mxu0 0.0
  %2329 = vmatpush1.msra.mxu0 0.0
  %2330 = vmatprep.subr.mxu0 0.0
  %2331 = vmatpush1.msra.mxu0 0.0
  %2332 = vmatprep.subr.mxu0 0.0
  %2333 = vmatpush1.msra.mxu0 0.0
  %2334 = vmatprep.subr.mxu0 0.0
  %2335 = vmatpush1.msra.mxu0 0.0
  %2336 = vmatprep.subr.mxu0 0.0
  %2337 = vmatpush1.msra.mxu0 0.0
  %2338 = vmatprep.subr.mxu0 0.0
  %2339 = vmatpush1.msra.mxu0 0.0
  %2340 = vmatprep.subr.mxu0 0.0
  %2341 = vmatpush1.msra.mxu0 0.0
  %2342 = vmatprep.subr.mxu0 0.0
  %2343 = vmatpush1.msra.mxu0 0.0
  %2344 = vmatprep.subr.mxu0 0.0
  %2345 = vmatpush1.msra.mxu0 0.0
  %2346 = vmatprep.subr.mxu0 0.0
  %2347 = vmatpush1.msra.mxu0 0.0
  %2348 = vmatprep.subr.mxu0 0.0
  %2349 = vmatpush1.msra.mxu0 0.0
  %2350 = vmatprep.subr.mxu0 0.0
  %2351 = vmatpush1.msra.mxu0 0.0
  %2352 = vmatprep.subr.mxu0 0.0
  %2353 = vmatpush1.msra.mxu0 0.0
  %2354 = vmatprep.subr.mxu0 0.0
  %2355 = vmatpush1.msra.mxu0 0.0
  %2356 = vmatprep.subr.mxu0 0.0
  %2357 = vmatpush1.msra.mxu0 0.0
  %2358 = vmatprep.subr.mxu0 0.0
  %2359 = vmatpush1.msra.mxu0 0.0
  %2360 = vmatprep.mubr.f32.mxu0 0.0
  %2361 = vmatmul.mubr.f32.gmra.mrb[0].mxu0 %v2294
  %v2362 = vpop.f32.mrb[0].mxu0
  %v2363 = vadd.f32 0.0, %v2362
  %v2364 = vpop.f32.mrb[0].mxu0
  %2365 = vdwg.mxu0
  %v2366 = vlaneseq
  %v2367 = vshrl.u32 %v2366, 7
  %v2368 = vsub.s32 0, %v2367
  %v2369 = vrot.slane %v2363, %v2368
  %v2370 = vsub.f32 %v2213, %v2369
  %v2371 = vsub.f32 %v2214, %v2369
  %v2372 = vmul.f32 %v2370, %v2370
  %v2373 = vmul.f32 %v2371, %v2371
  %v2374 = vadd.f32 %v2372, %v2373
  %v2375 = vrot.slane %v2374, 4
  %v2376 = vadd.f32 %v2374, %v2375
  %v2377 = vrot.slane %v2376, 2
  %v2378 = vadd.f32 %v2376, %v2377
  %v2379 = vrot.slane %v2378, 1
  %v2380 = vadd.f32 %v2378, %v2379
  %2381 = vmatprep.subr.mxu0 0.0
  %2382 = vmatpush1.msra.mxu0 %v46
  %2383 = vmatprep.subr.mxu0 0.0
  %2384 = vmatpush1.msra.mxu0 %v47
  %2385 = vmatprep.subr.mxu0 0.0
  %2386 = vmatpush1.msra.mxu0 %v48
  %2387 = vmatprep.subr.mxu0 0.0
  %2388 = vmatpush1.msra.mxu0 %v49
  %2389 = vmatprep.subr.mxu0 0.0
  %2390 = vmatpush1.msra.mxu0 %v50
  %2391 = vmatprep.subr.mxu0 0.0
  %2392 = vmatpush1.msra.mxu0 %v51
  %2393 = vmatprep.subr.mxu0 0.0
  %2394 = vmatpush1.msra.mxu0 %v52
  %2395 = vmatprep.subr.mxu0 0.0
  %2396 = vmatpush1.msra.mxu0 %v53
  %2397 = vmatprep.subr.mxu0 0.0
  %2398 = vmatpush1.msra.mxu0 %v54
  %2399 = vmatprep.subr.mxu0 0.0
  %2400 = vmatpush1.msra.mxu0 %v55
  %2401 = vmatprep.subr.mxu0 0.0
  %2402 = vmatpush1.msra.mxu0 %v56
  %2403 = vmatprep.subr.mxu0 0.0
  %2404 = vmatpush1.msra.mxu0 %v57
  %2405 = vmatprep.subr.mxu0 0.0
  %2406 = vmatpush1.msra.mxu0 %v58
  %2407 = vmatprep.subr.mxu0 0.0
  %2408 = vmatpush1.msra.mxu0 %v59
  %2409 = vmatprep.subr.mxu0 0.0
  %2410 = vmatpush1.msra.mxu0 %v60
  %2411 = vmatprep.subr.mxu0 0.0
  %2412 = vmatpush1.msra.mxu0 %v61
  %2413 = vmatprep.subr.mxu0 0.0
  %2414 = vmatpush1.msra.mxu0 0.0
  %2415 = vmatprep.subr.mxu0 0.0
  %2416 = vmatpush1.msra.mxu0 0.0
  %2417 = vmatprep.subr.mxu0 0.0
  %2418 = vmatpush1.msra.mxu0 0.0
  %2419 = vmatprep.subr.mxu0 0.0
  %2420 = vmatpush1.msra.mxu0 0.0
  %2421 = vmatprep.subr.mxu0 0.0
  %2422 = vmatpush1.msra.mxu0 0.0
  %2423 = vmatprep.subr.mxu0 0.0
  %2424 = vmatpush1.msra.mxu0 0.0
  %2425 = vmatprep.subr.mxu0 0.0
  %2426 = vmatpush1.msra.mxu0 0.0
  %2427 = vmatprep.subr.mxu0 0.0
  %2428 = vmatpush1.msra.mxu0 0.0
  %2429 = vmatprep.subr.mxu0 0.0
  %2430 = vmatpush1.msra.mxu0 0.0
  %2431 = vmatprep.subr.mxu0 0.0
  %2432 = vmatpush1.msra.mxu0 0.0
  %2433 = vmatprep.subr.mxu0 0.0
  %2434 = vmatpush1.msra.mxu0 0.0
  %2435 = vmatprep.subr.mxu0 0.0
  %2436 = vmatpush1.msra.mxu0 0.0
  %2437 = vmatprep.subr.mxu0 0.0
  %2438 = vmatpush1.msra.mxu0 0.0
  %2439 = vmatprep.subr.mxu0 0.0
  %2440 = vmatpush1.msra.mxu0 0.0
  %2441 = vmatprep.subr.mxu0 0.0
  %2442 = vmatpush1.msra.mxu0 0.0
  %2443 = vmatprep.subr.mxu0 0.0
  %2444 = vmatpush1.msra.mxu0 0.0
  %2445 = vmatprep.mubr.f32.mxu0 0.0
  %2446 = vmatmul.mubr.f32.gmra.mrb[0].mxu0 %v2380
  %v2447 = vpop.f32.mrb[0].mxu0
  %v2448 = vadd.f32 0.0, %v2447
  %v2449 = vpop.f32.mrb[0].mxu0
  %2450 = vdwg.mxu0
  %v2451 = vmul.f32 %v2448, 0.0078125
  %v2452 = vadd.f32 %v2451, 1e-05
  %v2453 = vrsqrt.pop %v2452
  %v2455 = vsel %vm66, %v2453, 0
  %2457 = vmatprep.subr.mxu0 0.0
  %2458 = vmatpush1.msra.mxu0 %v62
  %2459 = vmatprep.subr.mxu0 0.0
  %2460 = vmatpush1.msra.mxu0 %v63
  %2461 = vmatprep.subr.mxu0 0.0
  %2462 = vmatpush1.msra.mxu0 0.0
  %2463 = vmatprep.subr.mxu0 0.0
  %2464 = vmatpush1.msra.mxu0 0.0
  %2465 = vmatprep.subr.mxu0 0.0
  %2466 = vmatpush1.msra.mxu0 0.0
  %2467 = vmatprep.subr.mxu0 0.0
  %2468 = vmatpush1.msra.mxu0 0.0
  %2469 = vmatprep.subr.mxu0 0.0
  %2470 = vmatpush1.msra.mxu0 0.0
  %2471 = vmatprep.subr.mxu0 0.0
  %2472 = vmatpush1.msra.mxu0 0.0
  %2473 = vmatprep.subr.mxu0 0.0
  %2474 = vmatpush1.msra.mxu0 0.0
  %2475 = vmatprep.subr.mxu0 0.0
  %2476 = vmatpush1.msra.mxu0 0.0
  %2477 = vmatprep.subr.mxu0 0.0
  %2478 = vmatpush1.msra.mxu0 0.0
  %2479 = vmatprep.subr.mxu0 0.0
  %2480 = vmatpush1.msra.mxu0 0.0
  %2481 = vmatprep.subr.mxu0 0.0
  %2482 = vmatpush1.msra.mxu0 0.0
  %2483 = vmatprep.subr.mxu0 0.0
  %2484 = vmatpush1.msra.mxu0 0.0
  %2485 = vmatprep.subr.mxu0 0.0
  %2486 = vmatpush1.msra.mxu0 0.0
  %2487 = vmatprep.subr.mxu0 0.0
  %2488 = vmatpush1.msra.mxu0 0.0
  %2489 = vmatprep.subr.mxu0 0.0
  %2490 = vmatpush1.msra.mxu0 0.0
  %2491 = vmatprep.subr.mxu0 0.0
  %2492 = vmatpush1.msra.mxu0 0.0
  %2493 = vmatprep.subr.mxu0 0.0
  %2494 = vmatpush1.msra.mxu0 0.0
  %2495 = vmatprep.subr.mxu0 0.0
  %2496 = vmatpush1.msra.mxu0 0.0
  %2497 = vmatprep.subr.mxu0 0.0
  %2498 = vmatpush1.msra.mxu0 0.0
  %2499 = vmatprep.subr.mxu0 0.0
  %2500 = vmatpush1.msra.mxu0 0.0
  %2501 = vmatprep.subr.mxu0 0.0
  %2502 = vmatpush1.msra.mxu0 0.0
  %2503 = vmatprep.subr.mxu0 0.0
  %2504 = vmatpush1.msra.mxu0 0.0
  %2505 = vmatprep.subr.mxu0 0.0
  %2506 = vmatpush1.msra.mxu0 0.0
  %2507 = vmatprep.subr.mxu0 0.0
  %2508 = vmatpush1.msra.mxu0 0.0
  %2509 = vmatprep.subr.mxu0 0.0
  %2510 = vmatpush1.msra.mxu0 0.0
  %2511 = vmatprep.subr.mxu0 0.0
  %2512 = vmatpush1.msra.mxu0 0.0
  %2513 = vmatprep.subr.mxu0 0.0
  %2514 = vmatpush1.msra.mxu0 0.0
  %2515 = vmatprep.subr.mxu0 0.0
  %2516 = vmatpush1.msra.mxu0 0.0
  %2517 = vmatprep.subr.mxu0 0.0
  %2518 = vmatpush1.msra.mxu0 0.0
  %2519 = vmatprep.subr.mxu0 0.0
  %2520 = vmatpush1.msra.mxu0 0.0
  %2521 = vmatprep.mubr.f32.mxu0 0.0
  %2522 = vmatmul.mubr.f32.gmra.mrb[0].mxu0 %v2455
  %v2523 = vpop.f32.mrb[0].mxu0
  %v2524 = vadd.f32 0.0, %v2523
  %v2525 = vpop.f32.mrb[0].mxu0
  %2526 = vdwg.mxu0
  %v2527 = vlaneseq
  %v2528 = vshrl.u32 %v2527, 7
  %v2529 = vsub.s32 0, %v2528
  %v2530 = vrot.slane %v2524, %v2529
  %v2531 = vmul.f32 %v2370, %v2530
  %v2532 = vmul.f32 %v2371, %v2530
  %v2533 = vld [vmem:[%s4 + $0x2] sm:$0x1]
  %v2534 = vlaneseq
  %v2535 = vshrl.u32 %v2534, 7
  %v2536 = vsub.s32 0, %v2535
  %v2537 = vrot.slane %v2533, %v2536
  %v2538 = vmul.f32 %v2531, %v2537
  %v2539 = vmul.f32 %v2532, %v2537
  %v2540 = vld [vmem:[%s5 + $0x2] sm:$0x1]
  %v2541 = vlaneseq
  %v2542 = vshrl.u32 %v2541, 7
  %v2543 = vsub.s32 0, %v2542
  %v2544 = vrot.slane %v2540, %v2543
  %v2545 = vadd.f32 %v2538, %v2544
  %v2546 = vadd.f32 %v2539, %v2544
  %v2547 = vmax.f32 %v2545, 0.0
  %v2548 = vmax.f32 %v2546, 0.0
  %2549 = vst [vmem:[%s8] sm:$0xff] %v2547
  %2550 = vst [vmem:[%s8 + $0x8] sm:$0xff] %v2548
  // Predicated region
  $region34: #{single_top_view_pathway.1} parent=0 // pred_check
    _
  $region35: #{single_top_view_pathway.1} parent=0 // pred_check_branch
    %2552 = sbr.rel (0) target = $region37
  $region36: #{single_top_view_pathway.1} parent=0 // pred_region
    _
  $region37: #{single_top_view_pathway.1} parent=0 // pred_fallthru
    _
  // Predicated region
  $region38: #{single_top_view_pathway.1} parent=0 // pred_check
    _
  $region39: #{single_top_view_pathway.1} parent=0 // pred_check_branch
    %2554 = sbr.rel (0) target = $region41
  $region40: #{single_top_view_pathway.1} parent=0 // pred_region
    _
  $region41: #{single_top_view_pathway.1} parent=0 // pred_fallthru
    _

</llo_original>
